<compile_context>
chip_gen: v5e
topology: v5e:2x2
jax: 0.10.0
libtpu: 0.0.40
codegen_flags: <defaults>
</compile_context>

<pallas_src>
import math

import jax
import jax.numpy as jnp
from jax.experimental import pallas as pl
from jax.experimental.pallas import tpu as pltpu

# ----------------------------- tiny config ----------------------------------
D_MODEL = 32
N_LAYER = 2
PADDED_VOCAB = 128                 # padded_vocab_size (lane-dense lm_head)
D_STATE = 16                       # SSM state size N
D_CONV = 4
EXPAND = 2
D_INNER = EXPAND * D_MODEL         # 64
DT_RANK = math.ceil(D_MODEL / 16)  # 2
EPS = 1e-5                         # norm_epsilon

BATCH = 2                          # packed along lanes inside the kernel
SEQ = 8

# packed (batch-along-lanes) widths
PK_D = BATCH * D_MODEL             # 64   residual-stream lanes
PK_E = BATCH * D_INNER             # 128  inner-activation lanes
IN_COLS = 2 * PK_E                 # 256  [xz_b0 | xz_b1 | res_b0 | res_b1]
SSM_COLS = 256                     # [dpre_b0|dpre_b1|B0|C0|B1|C1|pad] (192 used)
HEAD_COLS = BATCH * PADDED_VOCAB   # 256  [logits_b0 | logits_b1]


# ----------------------------- kernel helpers --------------------------------
def _silu(x):
    return x * jax.nn.sigmoid(x)


def _softplus(x):
    # matches torch.nn.functional.softplus (threshold=20), log1p for accuracy
    return jnp.where(x > 20.0, x, jnp.log1p(jnp.exp(x)))


# ----------------------------- fused forward kernel --------------------------
def mamba_fused_kernel(
    x_ref,        # (L, PK_D)                 f32   lane-packed embedded tokens
    norm_w_ref,   # (N_LAYER, 1, PK_D)        f32   per-block RMSNorm weight
    in_w_ref,     # (N_LAYER, PK_D, IN_COLS)  bf16  block-diag in_proj
    conv_w_ref,   # (N_LAYER, K, PK_E)        f32   depthwise conv weight
    conv_b_ref,   # (N_LAYER, 1, PK_E)        f32
    ssm_w_ref,    # (N_LAYER, PK_E, SSM_COLS) bf16  x_proj with dt_proj folded in
    dt_b_ref,     # (N_LAYER, 1, PK_E)        f32
    A_ref,        # (N_LAYER, S, PK_E)        f32   A = -exp(A_log), precomputed
    D_ref,        # (N_LAYER, 1, PK_E)        f32
    out_w_ref,    # (N_LAYER, PK_E, PK_D)     bf16  block-diag out_proj
    norm_f_ref,   # (1, PK_D)                 f32   final RMSNorm weight
    head_w_ref,   # (PK_D, HEAD_COLS)         bf16  tied lm_head, block-diag
    o_ref,        # (B, L, V)                 f32   logits
):
    h = x_ref[...]                                  # (L, PK_D) residual stream
    L = h.shape[0]
    dm = D_MODEL
    E = D_INNER
    S = A_ref.shape[1]
    K = conv_w_ref.shape[1]
    V = o_ref.shape[2]

    # lane-half masks: batch 0 = low lanes, batch 1 = high lanes
    d_lane = jax.lax.broadcasted_iota(jnp.int32, (L, PK_D), 1)
    d_is_b0 = d_lane < dm
    e_row = jax.lax.broadcasted_iota(jnp.int32, (L, PK_E), 0)       # time index
    e_lane3 = jax.lax.broadcasted_iota(jnp.int32, (L, S, PK_E), 2)
    e_is_b0_3 = e_lane3 < E

    def rmsnorm_packed(x, w):
        # per-batch-half RMS over the packed lane axis
        sq = x * x
        s0 = jnp.sum(jnp.where(d_is_b0, sq, 0.0), axis=-1, keepdims=True)
        s1 = jnp.sum(jnp.where(d_is_b0, 0.0, sq), axis=-1, keepdims=True)
        r0 = jax.lax.rsqrt(s0 * (1.0 / dm) + EPS)
        r1 = jax.lax.rsqrt(s1 * (1.0 / dm) + EPS)
        return x * jnp.where(d_is_b0, r0, r1) * w

    for li in range(N_LAYER):
        # ---- pre-mixer RMSNorm ------------------------------------------------
        xn = rmsnorm_packed(h, norm_w_ref[li])                      # (L, PK_D)

        # ---- fused in_proj: one lane-dense MXU pass ---------------------------
        xzres = jnp.dot(xn.astype(jnp.bfloat16), in_w_ref[li],
                        preferred_element_type=jnp.float32)         # (L, 256)
        xz = xzres[:, :PK_E]                                        # (L, 128)
        res = xzres[:, PK_E:]                                       # (L, 128)

        # ---- causal depthwise conv: in-register sublane rolls + masks ---------
        conv_w_l = conv_w_ref[li]                                   # (K, PK_E)
        acc = conv_b_ref[li] + xz * conv_w_l[K - 1:K, :]            # tap delay 0
        for d in range(1, K):
            shifted = pltpu.roll(xz, d, axis=0)                     # row t <- t-d
            shifted = jnp.where(e_row >= d, shifted, 0.0)           # causal mask
            acc = acc + shifted * conv_w_l[K - 1 - d:K - d, :]
        u = _silu(acc)                                              # (L, PK_E)

        # ---- fused x_proj (+ folded dt_proj): one MXU pass --------------------
        dbc = jnp.dot(u.astype(jnp.bfloat16), ssm_w_ref[li],
                      preferred_element_type=jnp.float32)           # (L, 256)
        delta = _softplus(dbc[:, :PK_E] + dt_b_ref[li])             # (L, 128)
        B0 = dbc[:, PK_E:PK_E + S]                                  # (L, S)
        C0 = dbc[:, PK_E + S:PK_E + 2 * S]
        B1 = dbc[:, PK_E + 2 * S:PK_E + 3 * S]
        C1 = dbc[:, PK_E + 3 * S:PK_E + 4 * S]

        # broadcast B/C across each batch half's lanes (off the serial chain)
        B_bc = jnp.where(e_is_b0_3, B0[:, :, None], B1[:, :, None])  # (L,S,PK_E)
        C_bc = jnp.where(e_is_b0_3, C0[:, :, None], C1[:, :, None])

        # hoist exp(delta*A) and delta*u*B out of the serial scan
        A_l = A_ref[li]                                             # (S, PK_E)
        dA_all = jnp.exp(delta[:, None, :] * A_l[None, :, :])       # (L,S,PK_E)
        dBu_all = (delta * u)[:, None, :] * B_bc                    # (L,S,PK_E)

        # ---- selective scan: per step only one VPU mul+add on (S, PK_E) -------
        ssm = jnp.zeros((S, PK_E), jnp.float32)
        ssm_steps = []
        for t in range(L):
            ssm = dA_all[t] * ssm + dBu_all[t]
            ssm_steps.append(ssm)
        ssm_all = jnp.stack(ssm_steps, axis=0)                      # (L,S,PK_E)

        # deferred C contraction: one dense reduce instead of 8 tiny ones
        y = jnp.sum(ssm_all * C_bc, axis=1)                         # (L, PK_E)
        y = y + u * D_ref[li]                                       # skip term u*D
        y = y * _silu(res)                                          # gate

        # ---- out_proj + residual ----------------------------------------------
        h = h + jnp.dot(y.astype(jnp.bfloat16), out_w_ref[li],
                        preferred_element_type=jnp.float32)         # (L, PK_D)

    # ---- final RMSNorm + tied lm_head (both batch halves in one MXU pass) ----
    xn = rmsnorm_packed(h, norm_f_ref[...])
    logits = jnp.dot(xn.astype(jnp.bfloat16), head_w_ref[...],
                     preferred_element_type=jnp.float32)            # (L, 2V)
    o_ref[0] = logits[:, :V]
    o_ref[1] = logits[:, V:]


# ----------------------------- wrapper ----------------------------------------
def mamba_forward(input_ids, params):
    pk = params["packed"]
    emb = params["raw"]["emb"]
    h0 = jnp.take(emb, input_ids, axis=0)                # (B, L, D) — JAX glue
    B, L, _ = h0.shape
    assert B == BATCH, "kernel packs exactly two batch elements along lanes"
    # lane-pack the batch: lanes [0, D) = batch 0, [D, 2D) = batch 1
    x_packed = jnp.concatenate([h0[0], h0[1]], axis=-1)  # (L, 2D)

    vmem = pl.BlockSpec(memory_space=pltpu.MemorySpace.VMEM)
    kernel = pl.pallas_call(
        mamba_fused_kernel,
        out_shape=jax.ShapeDtypeStruct((B, L, PADDED_VOCAB), jnp.float32),
        in_specs=[vmem] * 12,
        out_specs=vmem,
    )
    return kernel(x_packed, pk["norm_w"], pk["in_w"], pk["conv_w"],
                  pk["conv_b"], pk["ssm_w"], pk["dt_b"], pk["A"], pk["D"],
                  pk["out_w"], pk["norm_f"], pk["head_w"])


# ----------------------------- deterministic params --------------------------
def init_params(key):
    keys = jax.random.split(key, 1 + N_LAYER)
    emb = jax.random.normal(keys[0], (PADDED_VOCAB, D_MODEL), jnp.float32) * 0.02

    def rnd(k, shape, s):
        return jax.random.normal(k, shape, jnp.float32) * s

    raw = {n: [] for n in ("norm_w", "in_x", "in_res", "conv_w", "conv_b",
                           "xp_dt", "xp_B", "xp_C", "dt_w", "dt_b",
                           "A", "D", "out_w")}
    for i in range(N_LAYER):
        ks = jax.random.split(keys[1 + i], 8)
        raw["norm_w"].append(jnp.ones((D_MODEL,), jnp.float32))
        raw["in_x"].append(rnd(ks[0], (D_MODEL, D_INNER), 0.05))
        raw["in_res"].append(rnd(ks[1], (D_MODEL, D_INNER), 0.05))
        raw["conv_w"].append(rnd(ks[2], (D_CONV, D_INNER), 0.2))
        raw["conv_b"].append(jnp.zeros((D_INNER,), jnp.float32))
        raw["xp_dt"].append(rnd(ks[3], (D_INNER, DT_RANK), 0.05))
        raw["xp_B"].append(rnd(ks[4], (D_INNER, D_STATE), 0.05))
        raw["xp_C"].append(rnd(ks[5], (D_INNER, D_STATE), 0.05))
        raw["dt_w"].append(rnd(ks[6], (DT_RANK, D_INNER), 0.2))
        raw["dt_b"].append(jnp.full((D_INNER,), -2.0, jnp.float32))
        # S4D-real init: A_log = log(n+1)  ->  A = -exp(A_log) = -(n+1)
        raw["A"].append(-jnp.tile(
            jnp.arange(1, D_STATE + 1, dtype=jnp.float32)[:, None],
            (1, D_INNER)))
        raw["D"].append(jnp.ones((D_INNER,), jnp.float32))
        raw["out_w"].append(rnd(ks[7], (D_INNER, D_MODEL), 0.05))
    raw = {k: jnp.stack(v) for k, v in raw.items()}
    raw["emb"] = emb
    raw["norm_f"] = jnp.ones((D_MODEL,), jnp.float32)

    # ---- batch-lane-packed / block-diagonal kernel weights -------------------
    D, E, S, V = D_MODEL, D_INNER, D_STATE, PADDED_VOCAB
    z_de = jnp.zeros((D, E), jnp.float32)
    z_dv = jnp.zeros((D, V), jnp.float32)
    z_ee = jnp.zeros((E, E), jnp.float32)
    z_es = jnp.zeros((E, S), jnp.float32)
    z_ed = jnp.zeros((E, D), jnp.float32)

    def tile2(x):            # duplicate along the last (lane) axis: [x | x]
        return jnp.concatenate([x, x], axis=-1)

    in_w, ssm_w, out_w = [], [], []
    ssm_pad = SSM_COLS - (2 * E + 4 * S)
    for i in range(N_LAYER):
        ix, ir = raw["in_x"][i], raw["in_res"][i]
        top = jnp.concatenate([ix, z_de, ir, z_de], axis=1)         # (D, 4E)
        bot = jnp.concatenate([z_de, ix, z_de, ir], axis=1)
        in_w.append(jnp.concatenate([top, bot], axis=0))            # (2D, 4E)

        dmap = raw["xp_dt"][i] @ raw["dt_w"][i]                     # (E,E) dt fold
        xb, xc_ = raw["xp_B"][i], raw["xp_C"][i]
        z_pad = jnp.zeros((E, ssm_pad), jnp.float32)
        top = jnp.concatenate([dmap, z_ee, xb, xc_, z_es, z_es, z_pad], axis=1)
        bot = jnp.concatenate([z_ee, dmap, z_es, z_es, xb, xc_, z_pad], axis=1)
        ssm_w.append(jnp.concatenate([top, bot], axis=0))           # (2E, 256)

        ow = raw["out_w"][i]
        top = jnp.concatenate([ow, z_ed], axis=1)                   # (E, 2D)
        bot = jnp.concatenate([z_ed, ow], axis=1)
        out_w.append(jnp.concatenate([top, bot], axis=0))           # (2E, 2D)

    emb_t = emb.T                                                   # (D, V)
    head_w = jnp.concatenate(
        [jnp.concatenate([emb_t, z_dv], axis=1),
         jnp.concatenate([z_dv, emb_t], axis=1)], axis=0)           # (2D, 2V)

    packed = dict(
        norm_w=tile2(raw["norm_w"])[:, None, :],                    # (NL, 1, 2D)
        in_w=jnp.stack(in_w).astype(jnp.bfloat16),                  # (NL, 2D, 256)
        conv_w=tile2(raw["conv_w"]),                                # (NL, K, 2E)
        conv_b=tile2(raw["conv_b"])[:, None, :],                    # (NL, 1, 2E)
        ssm_w=jnp.stack(ssm_w).astype(jnp.bfloat16),                # (NL, 2E, 256)
        dt_b=tile2(raw["dt_b"])[:, None, :],                        # (NL, 1, 2E)
        A=tile2(raw["A"]),                                          # (NL, S, 2E)
        D=tile2(raw["D"])[:, None, :],                              # (NL, 1, 2E)
        out_w=jnp.stack(out_w).astype(jnp.bfloat16),                # (NL, 2E, 2D)
        norm_f=tile2(raw["norm_f"])[None, :],                       # (1, 2D)
        head_w=head_w.astype(jnp.bfloat16),                         # (2D, 2V)
    )
    return dict(raw=raw, packed=packed)


# ----------------------------- plain-JAX reference ---------------------------
def mamba_reference(input_ids, raw):
    """Straightforward float32 reference of the minimamba forward."""
    h = raw["emb"][input_ids]                                       # (B, L, D)
    L = h.shape[1]
    for li in range(N_LAYER):
        xn = h * jax.lax.rsqrt(jnp.mean(h * h, -1, keepdims=True) + EPS)
        xn = xn * raw["norm_w"][li]
        xz = xn @ raw["in_x"][li]                                   # (B, L, E)
        res = xn @ raw["in_res"][li]
        xpad = jnp.pad(xz, ((0, 0), (D_CONV - 1, 0), (0, 0)))
        conv = raw["conv_b"][li] + sum(
            xpad[:, k:k + L, :] * raw["conv_w"][li][k] for k in range(D_CONV))
        u = jax.nn.silu(conv)
        dt_in = u @ raw["xp_dt"][li]
        Bm = u @ raw["xp_B"][li]
        Cm = u @ raw["xp_C"][li]
        delta = jax.nn.softplus(dt_in @ raw["dt_w"][li] + raw["dt_b"][li])
        dA = jnp.exp(delta[..., None, :] * raw["A"][li])            # (B,L,S,E)
        dBu = (delta * u)[..., None, :] * Bm[..., :, None]          # (B,L,S,E)
        ssm = jnp.zeros((h.shape[0], D_STATE, D_INNER), jnp.float32)
        ys = []
        for t in range(L):
            ssm = dA[:, t] * ssm + dBu[:, t]
            ys.append(jnp.sum(ssm * Cm[:, t, :, None], axis=1))
        y = jnp.stack(ys, axis=1)                                   # (B, L, E)
        y = y + u * raw["D"][li]
        y = y * jax.nn.silu(res)
        h = h + y @ raw["out_w"][li]
    h = h * jax.lax.rsqrt(jnp.mean(h * h, -1, keepdims=True) + EPS)
    h = h * raw["norm_f"]
    return h @ raw["emb"].T                                         # (B, L, V)


# ----------------------------- driver -----------------------------------------
if __name__ == "__main__":
    key = jax.random.PRNGKey(0)
    k_ids, k_params = jax.random.split(key)
    params = init_params(k_params)

    input_ids = jax.random.randint(k_ids, (BATCH, SEQ), 0, PADDED_VOCAB,
                                   dtype=jnp.int32)

    # TODO(synk): inference_params (autoregressive cache / layer_idx state) is
    # not modeled; this implements the prefill (full-sequence) forward only.
    logits = jax.jit(mamba_forward)(input_ids, params)
    logits = jax.block_until_ready(logits)

    assert logits.shape == (BATCH, SEQ, PADDED_VOCAB), logits.shape
    assert logits.dtype == jnp.float32
    assert bool(jnp.all(jnp.isfinite(logits)))

    # numerics vs plain-JAX float32 reference (bf16 MXU tolerance)
    ref = mamba_reference(input_ids, params["raw"])
    err = float(jnp.max(jnp.abs(logits - ref)))
    assert err < 2e-2, f"max abs error vs reference: {err}"

    print("KERNEL_OK")
</pallas_src>

<mosaic_0001>
module attributes {stable_mosaic.version = 11 : i64} {
  func.func @mamba_fused_kernel(%arg0: memref<8x64xf32, #tpu.memory_space<vmem>>, %arg1: memref<2x1x64xf32, #tpu.memory_space<vmem>>, %arg2: memref<2x64x256xbf16, #tpu.memory_space<vmem>>, %arg3: memref<2x4x128xf32, #tpu.memory_space<vmem>>, %arg4: memref<2x1x128xf32, #tpu.memory_space<vmem>>, %arg5: memref<2x128x256xbf16, #tpu.memory_space<vmem>>, %arg6: memref<2x1x128xf32, #tpu.memory_space<vmem>>, %arg7: memref<2x16x128xf32, #tpu.memory_space<vmem>>, %arg8: memref<2x1x128xf32, #tpu.memory_space<vmem>>, %arg9: memref<2x128x64xbf16, #tpu.memory_space<vmem>>, %arg10: memref<1x64xf32, #tpu.memory_space<vmem>>, %arg11: memref<64x256xbf16, #tpu.memory_space<vmem>>, %arg12: memref<2x8x128xf32, #tpu.memory_space<vmem>>) attributes {dimension_semantics = [], scalar_prefetch = 0 : i64, scratch_operands = 0 : i64, tpu.core_type = #tpu.core_type<tc>} {
    %c0 = arith.constant 0 : index
    %c0_0 = arith.constant 0 : index
    %0 = vector.load %arg0[%c0, %c0_0] : memref<8x64xf32, #tpu.memory_space<vmem>>, vector<8x64xf32>
    %1 = tpu.iota {dimensions = array<i32: 1>} : vector<8x64xi32>
    %c32_i32 = arith.constant 32 : i32
    %2 = vector.broadcast %c32_i32 : i32 to vector<8x64xi32>
    %3 = arith.cmpi slt, %1, %2 : vector<8x64xi32>
    %4 = tpu.iota {dimensions = array<i32: 0>} : vector<8x128xi32>
    %5 = tpu.iota {dimensions = array<i32: 2>} : vector<8x16x128xi32>
    %c64_i32 = arith.constant 64 : i32
    %6 = vector.broadcast %c64_i32 : i32 to vector<8x16x128xi32>
    %7 = arith.cmpi slt, %5, %6 : vector<8x16x128xi32>
    %c0_1 = arith.constant 0 : index
    %c0_2 = arith.constant 0 : index
    %c0_3 = arith.constant 0 : index
    %8 = vector.load %arg1[%c0_1, %c0_2, %c0_3] : memref<2x1x64xf32, #tpu.memory_space<vmem>>, vector<1x1x64xf32>
    %9 = vector.shape_cast %8 : vector<1x1x64xf32> to vector<1x64xf32>
    %10 = arith.mulf %0, %0 : vector<8x64xf32>
    %cst = arith.constant 0.000000e+00 : f32
    %11 = vector.broadcast %cst : f32 to vector<8x64xf32>
    %12 = arith.select %3, %10, %11 : vector<8x64xi1>, vector<8x64xf32>
    %cst_4 = arith.constant dense<0.000000e+00> : vector<8xf32>
    %13 = vector.multi_reduction <add>, %12, %cst_4 [1] : vector<8x64xf32> to vector<8xf32>
    %14 = vector.shape_cast %13 : vector<8xf32> to vector<8x1xf32>
    %cst_5 = arith.constant 0.000000e+00 : f32
    %15 = vector.broadcast %cst_5 : f32 to vector<8x64xf32>
    %16 = arith.select %3, %15, %10 : vector<8x64xi1>, vector<8x64xf32>
    %cst_6 = arith.constant dense<0.000000e+00> : vector<8xf32>
    %17 = vector.multi_reduction <add>, %16, %cst_6 [1] : vector<8x64xf32> to vector<8xf32>
    %18 = vector.shape_cast %17 : vector<8xf32> to vector<8x1xf32>
    %cst_7 = arith.constant 3.125000e-02 : f32
    %19 = vector.broadcast %cst_7 : f32 to vector<8x1xf32>
    %20 = arith.mulf %14, %19 : vector<8x1xf32>
    %cst_8 = arith.constant 9.99999974E-6 : f32
    %21 = vector.broadcast %cst_8 : f32 to vector<8x1xf32>
    %22 = arith.addf %20, %21 : vector<8x1xf32>
    %23 = math.rsqrt %22 : vector<8x1xf32>
    %cst_9 = arith.constant 3.125000e-02 : f32
    %24 = vector.broadcast %cst_9 : f32 to vector<8x1xf32>
    %25 = arith.mulf %18, %24 : vector<8x1xf32>
    %cst_10 = arith.constant 9.99999974E-6 : f32
    %26 = vector.broadcast %cst_10 : f32 to vector<8x1xf32>
    %27 = arith.addf %25, %26 : vector<8x1xf32>
    %28 = math.rsqrt %27 : vector<8x1xf32>
    %29 = vector.shape_cast %23 : vector<8x1xf32> to vector<8x1xf32>
    %30 = vector.broadcast %29 : vector<8x1xf32> to vector<8x64xf32>
    %31 = vector.shape_cast %28 : vector<8x1xf32> to vector<8x1xf32>
    %32 = vector.broadcast %31 : vector<8x1xf32> to vector<8x64xf32>
    %33 = arith.select %3, %30, %32 : vector<8x64xi1>, vector<8x64xf32>
    %34 = arith.mulf %0, %33 : vector<8x64xf32>
    %35 = vector.broadcast %9 : vector<1x64xf32> to vector<8x64xf32>
    %36 = arith.mulf %34, %35 : vector<8x64xf32>
    %37 = arith.truncf %36 : vector<8x64xf32> to vector<8x64xbf16>
    %c0_11 = arith.constant 0 : index
    %c0_12 = arith.constant 0 : index
    %c0_13 = arith.constant 0 : index
    %38 = vector.load %arg2[%c0_11, %c0_12, %c0_13] : memref<2x64x256xbf16, #tpu.memory_space<vmem>>, vector<1x64x256xbf16>
    %39 = vector.shape_cast %38 : vector<1x64x256xbf16> to vector<64x256xbf16>
    %cst_14 = arith.constant dense<0.000000e+00> : vector<8x256xf32>
    %40 = tpu.matmul %37, %39, %cst_14 {dimension_numbers = #tpu.dot_dimension_numbers<[1], [0], [0], [1], [0, 0, 1, 1], [], []>} : vector<8x64xbf16>, vector<64x256xbf16>, vector<8x256xf32> -> vector<8x256xf32>
    %41 = vector.extract_strided_slice %40 {offsets = [0, 0], sizes = [8, 128], strides = [1, 1]} : vector<8x256xf32> to vector<8x128xf32>
    %42 = vector.extract_strided_slice %40 {offsets = [0, 128], sizes = [8, 128], strides = [1, 1]} : vector<8x256xf32> to vector<8x128xf32>
    %c0_15 = arith.constant 0 : index
    %c0_16 = arith.constant 0 : index
    %c0_17 = arith.constant 0 : index
    %43 = vector.load %arg3[%c0_15, %c0_16, %c0_17] : memref<2x4x128xf32, #tpu.memory_space<vmem>>, vector<1x4x128xf32>
    %44 = vector.shape_cast %43 : vector<1x4x128xf32> to vector<4x128xf32>
    %c0_18 = arith.constant 0 : index
    %c0_19 = arith.constant 0 : index
    %c0_20 = arith.constant 0 : index
    %45 = vector.load %arg4[%c0_18, %c0_19, %c0_20] : memref<2x1x128xf32, #tpu.memory_space<vmem>>, vector<1x1x128xf32>
    %46 = vector.shape_cast %45 : vector<1x1x128xf32> to vector<1x128xf32>
    %47 = vector.extract_strided_slice %44 {offsets = [3, 0], sizes = [1, 128], strides = [1, 1]} : vector<4x128xf32> to vector<1x128xf32>
    %48 = vector.broadcast %47 : vector<1x128xf32> to vector<8x128xf32>
    %49 = arith.mulf %41, %48 : vector<8x128xf32>
    %50 = vector.broadcast %46 : vector<1x128xf32> to vector<8x128xf32>
    %51 = arith.addf %50, %49 : vector<8x128xf32>
    %c1_i32 = arith.constant 1 : i32
    %52 = tpu.dynamic_rotate %41 by %c1_i32 dim 0 : vector<8x128xf32>, i32 -> vector<8x128xf32>
    %c1_i32_21 = arith.constant 1 : i32
    %53 = vector.broadcast %c1_i32_21 : i32 to vector<8x128xi32>
    %54 = arith.cmpi sge, %4, %53 : vector<8x128xi32>
    %cst_22 = arith.constant 0.000000e+00 : f32
    %55 = vector.broadcast %cst_22 : f32 to vector<8x128xf32>
    %56 = arith.select %54, %52, %55 : vector<8x128xi1>, vector<8x128xf32>
    %57 = vector.extract_strided_slice %44 {offsets = [2, 0], sizes = [1, 128], strides = [1, 1]} : vector<4x128xf32> to vector<1x128xf32>
    %58 = vector.broadcast %57 : vector<1x128xf32> to vector<8x128xf32>
    %59 = arith.mulf %56, %58 : vector<8x128xf32>
    %60 = arith.addf %51, %59 : vector<8x128xf32>
    %c2_i32 = arith.constant 2 : i32
    %61 = tpu.dynamic_rotate %41 by %c2_i32 dim 0 : vector<8x128xf32>, i32 -> vector<8x128xf32>
    %c2_i32_23 = arith.constant 2 : i32
    %62 = vector.broadcast %c2_i32_23 : i32 to vector<8x128xi32>
    %63 = arith.cmpi sge, %4, %62 : vector<8x128xi32>
    %cst_24 = arith.constant 0.000000e+00 : f32
    %64 = vector.broadcast %cst_24 : f32 to vector<8x128xf32>
    %65 = arith.select %63, %61, %64 : vector<8x128xi1>, vector<8x128xf32>
    %66 = vector.extract_strided_slice %44 {offsets = [1, 0], sizes = [1, 128], strides = [1, 1]} : vector<4x128xf32> to vector<1x128xf32>
    %67 = vector.broadcast %66 : vector<1x128xf32> to vector<8x128xf32>
    %68 = arith.mulf %65, %67 : vector<8x128xf32>
    %69 = arith.addf %60, %68 : vector<8x128xf32>
    %c3_i32 = arith.constant 3 : i32
    %70 = tpu.dynamic_rotate %41 by %c3_i32 dim 0 : vector<8x128xf32>, i32 -> vector<8x128xf32>
    %c3_i32_25 = arith.constant 3 : i32
    %71 = vector.broadcast %c3_i32_25 : i32 to vector<8x128xi32>
    %72 = arith.cmpi sge, %4, %71 : vector<8x128xi32>
    %cst_26 = arith.constant 0.000000e+00 : f32
    %73 = vector.broadcast %cst_26 : f32 to vector<8x128xf32>
    %74 = arith.select %72, %70, %73 : vector<8x128xi1>, vector<8x128xf32>
    %75 = vector.extract_strided_slice %44 {offsets = [0, 0], sizes = [1, 128], strides = [1, 1]} : vector<4x128xf32> to vector<1x128xf32>
    %76 = vector.broadcast %75 : vector<1x128xf32> to vector<8x128xf32>
    %77 = arith.mulf %74, %76 : vector<8x128xf32>
    %78 = arith.addf %69, %77 : vector<8x128xf32>
    %79 = arith.negf %78 : vector<8x128xf32>
    %80 = math.exp %79 : vector<8x128xf32>
    %cst_27 = arith.constant 1.000000e+00 : f32
    %81 = vector.broadcast %cst_27 : f32 to vector<8x128xf32>
    %82 = arith.addf %81, %80 : vector<8x128xf32>
    %83 = arith.divf %81, %82 : vector<8x128xf32>
    %84 = arith.mulf %78, %83 : vector<8x128xf32>
    %85 = arith.truncf %84 : vector<8x128xf32> to vector<8x128xbf16>
    %c0_28 = arith.constant 0 : index
    %c0_29 = arith.constant 0 : index
    %c0_30 = arith.constant 0 : index
    %86 = vector.load %arg5[%c0_28, %c0_29, %c0_30] : memref<2x128x256xbf16, #tpu.memory_space<vmem>>, vector<1x128x256xbf16>
    %87 = vector.shape_cast %86 : vector<1x128x256xbf16> to vector<128x256xbf16>
    %cst_31 = arith.constant dense<0.000000e+00> : vector<8x256xf32>
    %88 = tpu.matmul %85, %87, %cst_31 {dimension_numbers = #tpu.dot_dimension_numbers<[1], [0], [0], [1], [0, 0, 1, 1], [], []>} : vector<8x128xbf16>, vector<128x256xbf16>, vector<8x256xf32> -> vector<8x256xf32>
    %89 = vector.extract_strided_slice %88 {offsets = [0, 0], sizes = [8, 128], strides = [1, 1]} : vector<8x256xf32> to vector<8x128xf32>
    %c0_32 = arith.constant 0 : index
    %c0_33 = arith.constant 0 : index
    %c0_34 = arith.constant 0 : index
    %90 = vector.load %arg6[%c0_32, %c0_33, %c0_34] : memref<2x1x128xf32, #tpu.memory_space<vmem>>, vector<1x1x128xf32>
    %91 = vector.shape_cast %90 : vector<1x1x128xf32> to vector<1x128xf32>
    %92 = vector.broadcast %91 : vector<1x128xf32> to vector<8x128xf32>
    %93 = arith.addf %89, %92 : vector<8x128xf32>
    %cst_35 = arith.constant 2.000000e+01 : f32
    %94 = vector.broadcast %cst_35 : f32 to vector<8x128xf32>
    %95 = arith.cmpf ogt, %93, %94 : vector<8x128xf32>
    %96 = math.exp %93 : vector<8x128xf32>
    %97 = math.log1p %96 : vector<8x128xf32>
    %98 = arith.select %95, %93, %97 : vector<8x128xi1>, vector<8x128xf32>
    %99 = vector.extract_strided_slice %88 {offsets = [0, 128], sizes = [8, 16], strides = [1, 1]} : vector<8x256xf32> to vector<8x16xf32>
    %100 = vector.extract_strided_slice %88 {offsets = [0, 144], sizes = [8, 16], strides = [1, 1]} : vector<8x256xf32> to vector<8x16xf32>
    %101 = vector.extract_strided_slice %88 {offsets = [0, 160], sizes = [8, 16], strides = [1, 1]} : vector<8x256xf32> to vector<8x16xf32>
    %102 = vector.extract_strided_slice %88 {offsets = [0, 176], sizes = [8, 16], strides = [1, 1]} : vector<8x256xf32> to vector<8x16xf32>
    %103 = vector.shape_cast %99 : vector<8x16xf32> to vector<8x16x1xf32>
    %104 = vector.shape_cast %101 : vector<8x16xf32> to vector<8x16x1xf32>
    %105 = vector.shape_cast %103 : vector<8x16x1xf32> to vector<8x16x1xf32>
    %106 = vector.broadcast %105 : vector<8x16x1xf32> to vector<8x16x128xf32>
    %107 = vector.shape_cast %104 : vector<8x16x1xf32> to vector<8x16x1xf32>
    %108 = vector.broadcast %107 : vector<8x16x1xf32> to vector<8x16x128xf32>
    %109 = arith.select %7, %106, %108 : vector<8x16x128xi1>, vector<8x16x128xf32>
    %110 = vector.shape_cast %100 : vector<8x16xf32> to vector<8x16x1xf32>
    %111 = vector.shape_cast %102 : vector<8x16xf32> to vector<8x16x1xf32>
    %112 = vector.shape_cast %110 : vector<8x16x1xf32> to vector<8x16x1xf32>
    %113 = vector.broadcast %112 : vector<8x16x1xf32> to vector<8x16x128xf32>
    %114 = vector.shape_cast %111 : vector<8x16x1xf32> to vector<8x16x1xf32>
    %115 = vector.broadcast %114 : vector<8x16x1xf32> to vector<8x16x128xf32>
    %116 = arith.select %7, %113, %115 : vector<8x16x128xi1>, vector<8x16x128xf32>
    %c0_36 = arith.constant 0 : index
    %c0_37 = arith.constant 0 : index
    %c0_38 = arith.constant 0 : index
    %117 = vector.load %arg7[%c0_36, %c0_37, %c0_38] : memref<2x16x128xf32, #tpu.memory_space<vmem>>, vector<1x16x128xf32>
    %118 = vector.shape_cast %117 : vector<1x16x128xf32> to vector<16x128xf32>
    %119 = vector.shape_cast %98 : vector<8x128xf32> to vector<8x1x128xf32>
    %120 = vector.shape_cast %118 : vector<16x128xf32> to vector<1x16x128xf32>
    %121 = vector.broadcast %119 : vector<8x1x128xf32> to vector<8x16x128xf32>
    %122 = vector.broadcast %120 : vector<1x16x128xf32> to vector<8x16x128xf32>
    %123 = arith.mulf %121, %122 : vector<8x16x128xf32>
    %124 = math.exp %123 : vector<8x16x128xf32>
    %125 = arith.mulf %98, %84 : vector<8x128xf32>
    %126 = vector.shape_cast %125 : vector<8x128xf32> to vector<8x1x128xf32>
    %127 = vector.broadcast %126 : vector<8x1x128xf32> to vector<8x16x128xf32>
    %128 = arith.mulf %127, %109 : vector<8x16x128xf32>
    %cst_39 = arith.constant 0.000000e+00 : f32
    %129 = vector.broadcast %cst_39 : f32 to vector<16x128xf32>
    %130 = vector.extract_strided_slice %124 {offsets = [0, 0, 0], sizes = [1, 16, 128], strides = [1, 1, 1]} : vector<8x16x128xf32> to vector<1x16x128xf32>
    %131 = vector.shape_cast %130 : vector<1x16x128xf32> to vector<16x128xf32>
    %132 = arith.mulf %131, %129 : vector<16x128xf32>
    %133 = vector.extract_strided_slice %128 {offsets = [0, 0, 0], sizes = [1, 16, 128], strides = [1, 1, 1]} : vector<8x16x128xf32> to vector<1x16x128xf32>
    %134 = vector.shape_cast %133 : vector<1x16x128xf32> to vector<16x128xf32>
    %135 = arith.addf %132, %134 : vector<16x128xf32>
    %136 = vector.extract_strided_slice %124 {offsets = [1, 0, 0], sizes = [1, 16, 128], strides = [1, 1, 1]} : vector<8x16x128xf32> to vector<1x16x128xf32>
    %137 = vector.shape_cast %136 : vector<1x16x128xf32> to vector<16x128xf32>
    %138 = arith.mulf %137, %135 : vector<16x128xf32>
    %139 = vector.extract_strided_slice %128 {offsets = [1, 0, 0], sizes = [1, 16, 128], strides = [1, 1, 1]} : vector<8x16x128xf32> to vector<1x16x128xf32>
    %140 = vector.shape_cast %139 : vector<1x16x128xf32> to vector<16x128xf32>
    %141 = arith.addf %138, %140 : vector<16x128xf32>
    %142 = vector.extract_strided_slice %124 {offsets = [2, 0, 0], sizes = [1, 16, 128], strides = [1, 1, 1]} : vector<8x16x128xf32> to vector<1x16x128xf32>
    %143 = vector.shape_cast %142 : vector<1x16x128xf32> to vector<16x128xf32>
    %144 = arith.mulf %143, %141 : vector<16x128xf32>
    %145 = vector.extract_strided_slice %128 {offsets = [2, 0, 0], sizes = [1, 16, 128], strides = [1, 1, 1]} : vector<8x16x128xf32> to vector<1x16x128xf32>
    %146 = vector.shape_cast %145 : vector<1x16x128xf32> to vector<16x128xf32>
    %147 = arith.addf %144, %146 : vector<16x128xf32>
    %148 = vector.extract_strided_slice %124 {offsets = [3, 0, 0], sizes = [1, 16, 128], strides = [1, 1, 1]} : vector<8x16x128xf32> to vector<1x16x128xf32>
    %149 = vector.shape_cast %148 : vector<1x16x128xf32> to vector<16x128xf32>
    %150 = arith.mulf %149, %147 : vector<16x128xf32>
    %151 = vector.extract_strided_slice %128 {offsets = [3, 0, 0], sizes = [1, 16, 128], strides = [1, 1, 1]} : vector<8x16x128xf32> to vector<1x16x128xf32>
    %152 = vector.shape_cast %151 : vector<1x16x128xf32> to vector<16x128xf32>
    %153 = arith.addf %150, %152 : vector<16x128xf32>
    %154 = vector.extract_strided_slice %124 {offsets = [4, 0, 0], sizes = [1, 16, 128], strides = [1, 1, 1]} : vector<8x16x128xf32> to vector<1x16x128xf32>
    %155 = vector.shape_cast %154 : vector<1x16x128xf32> to vector<16x128xf32>
    %156 = arith.mulf %155, %153 : vector<16x128xf32>
    %157 = vector.extract_strided_slice %128 {offsets = [4, 0, 0], sizes = [1, 16, 128], strides = [1, 1, 1]} : vector<8x16x128xf32> to vector<1x16x128xf32>
    %158 = vector.shape_cast %157 : vector<1x16x128xf32> to vector<16x128xf32>
    %159 = arith.addf %156, %158 : vector<16x128xf32>
    %160 = vector.extract_strided_slice %124 {offsets = [5, 0, 0], sizes = [1, 16, 128], strides = [1, 1, 1]} : vector<8x16x128xf32> to vector<1x16x128xf32>
    %161 = vector.shape_cast %160 : vector<1x16x128xf32> to vector<16x128xf32>
    %162 = arith.mulf %161, %159 : vector<16x128xf32>
    %163 = vector.extract_strided_slice %128 {offsets = [5, 0, 0], sizes = [1, 16, 128], strides = [1, 1, 1]} : vector<8x16x128xf32> to vector<1x16x128xf32>
    %164 = vector.shape_cast %163 : vector<1x16x128xf32> to vector<16x128xf32>
    %165 = arith.addf %162, %164 : vector<16x128xf32>
    %166 = vector.extract_strided_slice %124 {offsets = [6, 0, 0], sizes = [1, 16, 128], strides = [1, 1, 1]} : vector<8x16x128xf32> to vector<1x16x128xf32>
    %167 = vector.shape_cast %166 : vector<1x16x128xf32> to vector<16x128xf32>
    %168 = arith.mulf %167, %165 : vector<16x128xf32>
    %169 = vector.extract_strided_slice %128 {offsets = [6, 0, 0], sizes = [1, 16, 128], strides = [1, 1, 1]} : vector<8x16x128xf32> to vector<1x16x128xf32>
    %170 = vector.shape_cast %169 : vector<1x16x128xf32> to vector<16x128xf32>
    %171 = arith.addf %168, %170 : vector<16x128xf32>
    %172 = vector.extract_strided_slice %124 {offsets = [7, 0, 0], sizes = [1, 16, 128], strides = [1, 1, 1]} : vector<8x16x128xf32> to vector<1x16x128xf32>
    %173 = vector.shape_cast %172 : vector<1x16x128xf32> to vector<16x128xf32>
    %174 = arith.mulf %173, %171 : vector<16x128xf32>
    %175 = vector.extract_strided_slice %128 {offsets = [7, 0, 0], sizes = [1, 16, 128], strides = [1, 1, 1]} : vector<8x16x128xf32> to vector<1x16x128xf32>
    %176 = vector.shape_cast %175 : vector<1x16x128xf32> to vector<16x128xf32>
    %177 = arith.addf %174, %176 : vector<16x128xf32>
    %178 = vector.shape_cast %135 : vector<16x128xf32> to vector<1x16x128xf32>
    %179 = vector.shape_cast %141 : vector<16x128xf32> to vector<1x16x128xf32>
    %180 = vector.shape_cast %147 : vector<16x128xf32> to vector<1x16x128xf32>
    %181 = vector.shape_cast %153 : vector<16x128xf32> to vector<1x16x128xf32>
    %182 = vector.shape_cast %159 : vector<16x128xf32> to vector<1x16x128xf32>
    %183 = vector.shape_cast %165 : vector<16x128xf32> to vector<1x16x128xf32>
    %184 = vector.shape_cast %171 : vector<16x128xf32> to vector<1x16x128xf32>
    %185 = vector.shape_cast %177 : vector<16x128xf32> to vector<1x16x128xf32>
    %186 = tpu.concatenate %178, %179, %180, %181, %182, %183, %184, %185 in 0 : vector<1x16x128xf32>, vector<1x16x128xf32>, vector<1x16x128xf32>, vector<1x16x128xf32>, vector<1x16x128xf32>, vector<1x16x128xf32>, vector<1x16x128xf32>, vector<1x16x128xf32> -> vector<8x16x128xf32>
    %187 = arith.mulf %186, %116 : vector<8x16x128xf32>
    %cst_40 = arith.constant dense<0.000000e+00> : vector<8x128xf32>
    %188 = vector.multi_reduction <add>, %187, %cst_40 [1] : vector<8x16x128xf32> to vector<8x128xf32>
    %c0_41 = arith.constant 0 : index
    %c0_42 = arith.constant 0 : index
    %c0_43 = arith.constant 0 : index
    %189 = vector.load %arg8[%c0_41, %c0_42, %c0_43] : memref<2x1x128xf32, #tpu.memory_space<vmem>>, vector<1x1x128xf32>
    %190 = vector.shape_cast %189 : vector<1x1x128xf32> to vector<1x128xf32>
    %191 = vector.broadcast %190 : vector<1x128xf32> to vector<8x128xf32>
    %192 = arith.mulf %84, %191 : vector<8x128xf32>
    %193 = arith.addf %188, %192 : vector<8x128xf32>
    %194 = arith.negf %42 : vector<8x128xf32>
    %195 = math.exp %194 : vector<8x128xf32>
    %cst_44 = arith.constant 1.000000e+00 : f32
    %196 = vector.broadcast %cst_44 : f32 to vector<8x128xf32>
    %197 = arith.addf %196, %195 : vector<8x128xf32>
    %198 = arith.divf %196, %197 : vector<8x128xf32>
    %199 = arith.mulf %42, %198 : vector<8x128xf32>
    %200 = arith.mulf %193, %199 : vector<8x128xf32>
    %201 = arith.truncf %200 : vector<8x128xf32> to vector<8x128xbf16>
    %c0_45 = arith.constant 0 : index
    %c0_46 = arith.constant 0 : index
    %c0_47 = arith.constant 0 : index
    %202 = vector.load %arg9[%c0_45, %c0_46, %c0_47] : memref<2x128x64xbf16, #tpu.memory_space<vmem>>, vector<1x128x64xbf16>
    %203 = vector.shape_cast %202 : vector<1x128x64xbf16> to vector<128x64xbf16>
    %cst_48 = arith.constant dense<0.000000e+00> : vector<8x64xf32>
    %204 = tpu.matmul %201, %203, %cst_48 {dimension_numbers = #tpu.dot_dimension_numbers<[1], [0], [0], [1], [0, 0, 1, 1], [], []>} : vector<8x128xbf16>, vector<128x64xbf16>, vector<8x64xf32> -> vector<8x64xf32>
    %205 = arith.addf %0, %204 : vector<8x64xf32>
    %c1 = arith.constant 1 : index
    %c0_49 = arith.constant 0 : index
    %c0_50 = arith.constant 0 : index
    %206 = vector.load %arg1[%c1, %c0_49, %c0_50] : memref<2x1x64xf32, #tpu.memory_space<vmem>>, vector<1x1x64xf32>
    %207 = vector.shape_cast %206 : vector<1x1x64xf32> to vector<1x64xf32>
    %208 = arith.mulf %205, %205 : vector<8x64xf32>
    %cst_51 = arith.constant 0.000000e+00 : f32
    %209 = vector.broadcast %cst_51 : f32 to vector<8x64xf32>
    %210 = arith.select %3, %208, %209 : vector<8x64xi1>, vector<8x64xf32>
    %cst_52 = arith.constant dense<0.000000e+00> : vector<8xf32>
    %211 = vector.multi_reduction <add>, %210, %cst_52 [1] : vector<8x64xf32> to vector<8xf32>
    %212 = vector.shape_cast %211 : vector<8xf32> to vector<8x1xf32>
    %cst_53 = arith.constant 0.000000e+00 : f32
    %213 = vector.broadcast %cst_53 : f32 to vector<8x64xf32>
    %214 = arith.select %3, %213, %208 : vector<8x64xi1>, vector<8x64xf32>
    %cst_54 = arith.constant dense<0.000000e+00> : vector<8xf32>
    %215 = vector.multi_reduction <add>, %214, %cst_54 [1] : vector<8x64xf32> to vector<8xf32>
    %216 = vector.shape_cast %215 : vector<8xf32> to vector<8x1xf32>
    %cst_55 = arith.constant 3.125000e-02 : f32
    %217 = vector.broadcast %cst_55 : f32 to vector<8x1xf32>
    %218 = arith.mulf %212, %217 : vector<8x1xf32>
    %cst_56 = arith.constant 9.99999974E-6 : f32
    %219 = vector.broadcast %cst_56 : f32 to vector<8x1xf32>
    %220 = arith.addf %218, %219 : vector<8x1xf32>
    %221 = math.rsqrt %220 : vector<8x1xf32>
    %cst_57 = arith.constant 3.125000e-02 : f32
    %222 = vector.broadcast %cst_57 : f32 to vector<8x1xf32>
    %223 = arith.mulf %216, %222 : vector<8x1xf32>
    %cst_58 = arith.constant 9.99999974E-6 : f32
    %224 = vector.broadcast %cst_58 : f32 to vector<8x1xf32>
    %225 = arith.addf %223, %224 : vector<8x1xf32>
    %226 = math.rsqrt %225 : vector<8x1xf32>
    %227 = vector.shape_cast %221 : vector<8x1xf32> to vector<8x1xf32>
    %228 = vector.broadcast %227 : vector<8x1xf32> to vector<8x64xf32>
    %229 = vector.shape_cast %226 : vector<8x1xf32> to vector<8x1xf32>
    %230 = vector.broadcast %229 : vector<8x1xf32> to vector<8x64xf32>
    %231 = arith.select %3, %228, %230 : vector<8x64xi1>, vector<8x64xf32>
    %232 = arith.mulf %205, %231 : vector<8x64xf32>
    %233 = vector.broadcast %207 : vector<1x64xf32> to vector<8x64xf32>
    %234 = arith.mulf %232, %233 : vector<8x64xf32>
    %235 = arith.truncf %234 : vector<8x64xf32> to vector<8x64xbf16>
    %c1_59 = arith.constant 1 : index
    %c0_60 = arith.constant 0 : index
    %c0_61 = arith.constant 0 : index
    %236 = vector.load %arg2[%c1_59, %c0_60, %c0_61] : memref<2x64x256xbf16, #tpu.memory_space<vmem>>, vector<1x64x256xbf16>
    %237 = vector.shape_cast %236 : vector<1x64x256xbf16> to vector<64x256xbf16>
    %cst_62 = arith.constant dense<0.000000e+00> : vector<8x256xf32>
    %238 = tpu.matmul %235, %237, %cst_62 {dimension_numbers = #tpu.dot_dimension_numbers<[1], [0], [0], [1], [0, 0, 1, 1], [], []>} : vector<8x64xbf16>, vector<64x256xbf16>, vector<8x256xf32> -> vector<8x256xf32>
    %239 = vector.extract_strided_slice %238 {offsets = [0, 0], sizes = [8, 128], strides = [1, 1]} : vector<8x256xf32> to vector<8x128xf32>
    %240 = vector.extract_strided_slice %238 {offsets = [0, 128], sizes = [8, 128], strides = [1, 1]} : vector<8x256xf32> to vector<8x128xf32>
    %c1_63 = arith.constant 1 : index
    %c0_64 = arith.constant 0 : index
    %c0_65 = arith.constant 0 : index
    %241 = vector.load %arg3[%c1_63, %c0_64, %c0_65] : memref<2x4x128xf32, #tpu.memory_space<vmem>>, vector<1x4x128xf32>
    %242 = vector.shape_cast %241 : vector<1x4x128xf32> to vector<4x128xf32>
    %c1_66 = arith.constant 1 : index
    %c0_67 = arith.constant 0 : index
    %c0_68 = arith.constant 0 : index
    %243 = vector.load %arg4[%c1_66, %c0_67, %c0_68] : memref<2x1x128xf32, #tpu.memory_space<vmem>>, vector<1x1x128xf32>
    %244 = vector.shape_cast %243 : vector<1x1x128xf32> to vector<1x128xf32>
    %245 = vector.extract_strided_slice %242 {offsets = [3, 0], sizes = [1, 128], strides = [1, 1]} : vector<4x128xf32> to vector<1x128xf32>
    %246 = vector.broadcast %245 : vector<1x128xf32> to vector<8x128xf32>
    %247 = arith.mulf %239, %246 : vector<8x128xf32>
    %248 = vector.broadcast %244 : vector<1x128xf32> to vector<8x128xf32>
    %249 = arith.addf %248, %247 : vector<8x128xf32>
    %c1_i32_69 = arith.constant 1 : i32
    %250 = tpu.dynamic_rotate %239 by %c1_i32_69 dim 0 : vector<8x128xf32>, i32 -> vector<8x128xf32>
    %c1_i32_70 = arith.constant 1 : i32
    %251 = vector.broadcast %c1_i32_70 : i32 to vector<8x128xi32>
    %252 = arith.cmpi sge, %4, %251 : vector<8x128xi32>
    %cst_71 = arith.constant 0.000000e+00 : f32
    %253 = vector.broadcast %cst_71 : f32 to vector<8x128xf32>
    %254 = arith.select %252, %250, %253 : vector<8x128xi1>, vector<8x128xf32>
    %255 = vector.extract_strided_slice %242 {offsets = [2, 0], sizes = [1, 128], strides = [1, 1]} : vector<4x128xf32> to vector<1x128xf32>
    %256 = vector.broadcast %255 : vector<1x128xf32> to vector<8x128xf32>
    %257 = arith.mulf %254, %256 : vector<8x128xf32>
    %258 = arith.addf %249, %257 : vector<8x128xf32>
    %c2_i32_72 = arith.constant 2 : i32
    %259 = tpu.dynamic_rotate %239 by %c2_i32_72 dim 0 : vector<8x128xf32>, i32 -> vector<8x128xf32>
    %c2_i32_73 = arith.constant 2 : i32
    %260 = vector.broadcast %c2_i32_73 : i32 to vector<8x128xi32>
    %261 = arith.cmpi sge, %4, %260 : vector<8x128xi32>
    %cst_74 = arith.constant 0.000000e+00 : f32
    %262 = vector.broadcast %cst_74 : f32 to vector<8x128xf32>
    %263 = arith.select %261, %259, %262 : vector<8x128xi1>, vector<8x128xf32>
    %264 = vector.extract_strided_slice %242 {offsets = [1, 0], sizes = [1, 128], strides = [1, 1]} : vector<4x128xf32> to vector<1x128xf32>
    %265 = vector.broadcast %264 : vector<1x128xf32> to vector<8x128xf32>
    %266 = arith.mulf %263, %265 : vector<8x128xf32>
    %267 = arith.addf %258, %266 : vector<8x128xf32>
    %c3_i32_75 = arith.constant 3 : i32
    %268 = tpu.dynamic_rotate %239 by %c3_i32_75 dim 0 : vector<8x128xf32>, i32 -> vector<8x128xf32>
    %c3_i32_76 = arith.constant 3 : i32
    %269 = vector.broadcast %c3_i32_76 : i32 to vector<8x128xi32>
    %270 = arith.cmpi sge, %4, %269 : vector<8x128xi32>
    %cst_77 = arith.constant 0.000000e+00 : f32
    %271 = vector.broadcast %cst_77 : f32 to vector<8x128xf32>
    %272 = arith.select %270, %268, %271 : vector<8x128xi1>, vector<8x128xf32>
    %273 = vector.extract_strided_slice %242 {offsets = [0, 0], sizes = [1, 128], strides = [1, 1]} : vector<4x128xf32> to vector<1x128xf32>
    %274 = vector.broadcast %273 : vector<1x128xf32> to vector<8x128xf32>
    %275 = arith.mulf %272, %274 : vector<8x128xf32>
    %276 = arith.addf %267, %275 : vector<8x128xf32>
    %277 = arith.negf %276 : vector<8x128xf32>
    %278 = math.exp %277 : vector<8x128xf32>
    %cst_78 = arith.constant 1.000000e+00 : f32
    %279 = vector.broadcast %cst_78 : f32 to vector<8x128xf32>
    %280 = arith.addf %279, %278 : vector<8x128xf32>
    %281 = arith.divf %279, %280 : vector<8x128xf32>
    %282 = arith.mulf %276, %281 : vector<8x128xf32>
    %283 = arith.truncf %282 : vector<8x128xf32> to vector<8x128xbf16>
    %c1_79 = arith.constant 1 : index
    %c0_80 = arith.constant 0 : index
    %c0_81 = arith.constant 0 : index
    %284 = vector.load %arg5[%c1_79, %c0_80, %c0_81] : memref<2x128x256xbf16, #tpu.memory_space<vmem>>, vector<1x128x256xbf16>
    %285 = vector.shape_cast %284 : vector<1x128x256xbf16> to vector<128x256xbf16>
    %cst_82 = arith.constant dense<0.000000e+00> : vector<8x256xf32>
    %286 = tpu.matmul %283, %285, %cst_82 {dimension_numbers = #tpu.dot_dimension_numbers<[1], [0], [0], [1], [0, 0, 1, 1], [], []>} : vector<8x128xbf16>, vector<128x256xbf16>, vector<8x256xf32> -> vector<8x256xf32>
    %287 = vector.extract_strided_slice %286 {offsets = [0, 0], sizes = [8, 128], strides = [1, 1]} : vector<8x256xf32> to vector<8x128xf32>
    %c1_83 = arith.constant 1 : index
    %c0_84 = arith.constant 0 : index
    %c0_85 = arith.constant 0 : index
    %288 = vector.load %arg6[%c1_83, %c0_84, %c0_85] : memref<2x1x128xf32, #tpu.memory_space<vmem>>, vector<1x1x128xf32>
    %289 = vector.shape_cast %288 : vector<1x1x128xf32> to vector<1x128xf32>
    %290 = vector.broadcast %289 : vector<1x128xf32> to vector<8x128xf32>
    %291 = arith.addf %287, %290 : vector<8x128xf32>
    %cst_86 = arith.constant 2.000000e+01 : f32
    %292 = vector.broadcast %cst_86 : f32 to vector<8x128xf32>
    %293 = arith.cmpf ogt, %291, %292 : vector<8x128xf32>
    %294 = math.exp %291 : vector<8x128xf32>
    %295 = math.log1p %294 : vector<8x128xf32>
    %296 = arith.select %293, %291, %295 : vector<8x128xi1>, vector<8x128xf32>
    %297 = vector.extract_strided_slice %286 {offsets = [0, 128], sizes = [8, 16], strides = [1, 1]} : vector<8x256xf32> to vector<8x16xf32>
    %298 = vector.extract_strided_slice %286 {offsets = [0, 144], sizes = [8, 16], strides = [1, 1]} : vector<8x256xf32> to vector<8x16xf32>
    %299 = vector.extract_strided_slice %286 {offsets = [0, 160], sizes = [8, 16], strides = [1, 1]} : vector<8x256xf32> to vector<8x16xf32>
    %300 = vector.extract_strided_slice %286 {offsets = [0, 176], sizes = [8, 16], strides = [1, 1]} : vector<8x256xf32> to vector<8x16xf32>
    %301 = vector.shape_cast %297 : vector<8x16xf32> to vector<8x16x1xf32>
    %302 = vector.shape_cast %299 : vector<8x16xf32> to vector<8x16x1xf32>
    %303 = vector.shape_cast %301 : vector<8x16x1xf32> to vector<8x16x1xf32>
    %304 = vector.broadcast %303 : vector<8x16x1xf32> to vector<8x16x128xf32>
    %305 = vector.shape_cast %302 : vector<8x16x1xf32> to vector<8x16x1xf32>
    %306 = vector.broadcast %305 : vector<8x16x1xf32> to vector<8x16x128xf32>
    %307 = arith.select %7, %304, %306 : vector<8x16x128xi1>, vector<8x16x128xf32>
    %308 = vector.shape_cast %298 : vector<8x16xf32> to vector<8x16x1xf32>
    %309 = vector.shape_cast %300 : vector<8x16xf32> to vector<8x16x1xf32>
    %310 = vector.shape_cast %308 : vector<8x16x1xf32> to vector<8x16x1xf32>
    %311 = vector.broadcast %310 : vector<8x16x1xf32> to vector<8x16x128xf32>
    %312 = vector.shape_cast %309 : vector<8x16x1xf32> to vector<8x16x1xf32>
    %313 = vector.broadcast %312 : vector<8x16x1xf32> to vector<8x16x128xf32>
    %314 = arith.select %7, %311, %313 : vector<8x16x128xi1>, vector<8x16x128xf32>
    %c1_87 = arith.constant 1 : index
    %c0_88 = arith.constant 0 : index
    %c0_89 = arith.constant 0 : index
    %315 = vector.load %arg7[%c1_87, %c0_88, %c0_89] : memref<2x16x128xf32, #tpu.memory_space<vmem>>, vector<1x16x128xf32>
    %316 = vector.shape_cast %315 : vector<1x16x128xf32> to vector<16x128xf32>
    %317 = vector.shape_cast %296 : vector<8x128xf32> to vector<8x1x128xf32>
    %318 = vector.shape_cast %316 : vector<16x128xf32> to vector<1x16x128xf32>
    %319 = vector.broadcast %317 : vector<8x1x128xf32> to vector<8x16x128xf32>
    %320 = vector.broadcast %318 : vector<1x16x128xf32> to vector<8x16x128xf32>
    %321 = arith.mulf %319, %320 : vector<8x16x128xf32>
    %322 = math.exp %321 : vector<8x16x128xf32>
    %323 = arith.mulf %296, %282 : vector<8x128xf32>
    %324 = vector.shape_cast %323 : vector<8x128xf32> to vector<8x1x128xf32>
    %325 = vector.broadcast %324 : vector<8x1x128xf32> to vector<8x16x128xf32>
    %326 = arith.mulf %325, %307 : vector<8x16x128xf32>
    %cst_90 = arith.constant 0.000000e+00 : f32
    %327 = vector.broadcast %cst_90 : f32 to vector<16x128xf32>
    %328 = vector.extract_strided_slice %322 {offsets = [0, 0, 0], sizes = [1, 16, 128], strides = [1, 1, 1]} : vector<8x16x128xf32> to vector<1x16x128xf32>
    %329 = vector.shape_cast %328 : vector<1x16x128xf32> to vector<16x128xf32>
    %330 = arith.mulf %329, %327 : vector<16x128xf32>
    %331 = vector.extract_strided_slice %326 {offsets = [0, 0, 0], sizes = [1, 16, 128], strides = [1, 1, 1]} : vector<8x16x128xf32> to vector<1x16x128xf32>
    %332 = vector.shape_cast %331 : vector<1x16x128xf32> to vector<16x128xf32>
    %333 = arith.addf %330, %332 : vector<16x128xf32>
    %334 = vector.extract_strided_slice %322 {offsets = [1, 0, 0], sizes = [1, 16, 128], strides = [1, 1, 1]} : vector<8x16x128xf32> to vector<1x16x128xf32>
    %335 = vector.shape_cast %334 : vector<1x16x128xf32> to vector<16x128xf32>
    %336 = arith.mulf %335, %333 : vector<16x128xf32>
    %337 = vector.extract_strided_slice %326 {offsets = [1, 0, 0], sizes = [1, 16, 128], strides = [1, 1, 1]} : vector<8x16x128xf32> to vector<1x16x128xf32>
    %338 = vector.shape_cast %337 : vector<1x16x128xf32> to vector<16x128xf32>
    %339 = arith.addf %336, %338 : vector<16x128xf32>
    %340 = vector.extract_strided_slice %322 {offsets = [2, 0, 0], sizes = [1, 16, 128], strides = [1, 1, 1]} : vector<8x16x128xf32> to vector<1x16x128xf32>
    %341 = vector.shape_cast %340 : vector<1x16x128xf32> to vector<16x128xf32>
    %342 = arith.mulf %341, %339 : vector<16x128xf32>
    %343 = vector.extract_strided_slice %326 {offsets = [2, 0, 0], sizes = [1, 16, 128], strides = [1, 1, 1]} : vector<8x16x128xf32> to vector<1x16x128xf32>
    %344 = vector.shape_cast %343 : vector<1x16x128xf32> to vector<16x128xf32>
    %345 = arith.addf %342, %344 : vector<16x128xf32>
    %346 = vector.extract_strided_slice %322 {offsets = [3, 0, 0], sizes = [1, 16, 128], strides = [1, 1, 1]} : vector<8x16x128xf32> to vector<1x16x128xf32>
    %347 = vector.shape_cast %346 : vector<1x16x128xf32> to vector<16x128xf32>
    %348 = arith.mulf %347, %345 : vector<16x128xf32>
    %349 = vector.extract_strided_slice %326 {offsets = [3, 0, 0], sizes = [1, 16, 128], strides = [1, 1, 1]} : vector<8x16x128xf32> to vector<1x16x128xf32>
    %350 = vector.shape_cast %349 : vector<1x16x128xf32> to vector<16x128xf32>
    %351 = arith.addf %348, %350 : vector<16x128xf32>
    %352 = vector.extract_strided_slice %322 {offsets = [4, 0, 0], sizes = [1, 16, 128], strides = [1, 1, 1]} : vector<8x16x128xf32> to vector<1x16x128xf32>
    %353 = vector.shape_cast %352 : vector<1x16x128xf32> to vector<16x128xf32>
    %354 = arith.mulf %353, %351 : vector<16x128xf32>
    %355 = vector.extract_strided_slice %326 {offsets = [4, 0, 0], sizes = [1, 16, 128], strides = [1, 1, 1]} : vector<8x16x128xf32> to vector<1x16x128xf32>
    %356 = vector.shape_cast %355 : vector<1x16x128xf32> to vector<16x128xf32>
    %357 = arith.addf %354, %356 : vector<16x128xf32>
    %358 = vector.extract_strided_slice %322 {offsets = [5, 0, 0], sizes = [1, 16, 128], strides = [1, 1, 1]} : vector<8x16x128xf32> to vector<1x16x128xf32>
    %359 = vector.shape_cast %358 : vector<1x16x128xf32> to vector<16x128xf32>
    %360 = arith.mulf %359, %357 : vector<16x128xf32>
    %361 = vector.extract_strided_slice %326 {offsets = [5, 0, 0], sizes = [1, 16, 128], strides = [1, 1, 1]} : vector<8x16x128xf32> to vector<1x16x128xf32>
    %362 = vector.shape_cast %361 : vector<1x16x128xf32> to vector<16x128xf32>
    %363 = arith.addf %360, %362 : vector<16x128xf32>
    %364 = vector.extract_strided_slice %322 {offsets = [6, 0, 0], sizes = [1, 16, 128], strides = [1, 1, 1]} : vector<8x16x128xf32> to vector<1x16x128xf32>
    %365 = vector.shape_cast %364 : vector<1x16x128xf32> to vector<16x128xf32>
    %366 = arith.mulf %365, %363 : vector<16x128xf32>
    %367 = vector.extract_strided_slice %326 {offsets = [6, 0, 0], sizes = [1, 16, 128], strides = [1, 1, 1]} : vector<8x16x128xf32> to vector<1x16x128xf32>
    %368 = vector.shape_cast %367 : vector<1x16x128xf32> to vector<16x128xf32>
    %369 = arith.addf %366, %368 : vector<16x128xf32>
    %370 = vector.extract_strided_slice %322 {offsets = [7, 0, 0], sizes = [1, 16, 128], strides = [1, 1, 1]} : vector<8x16x128xf32> to vector<1x16x128xf32>
    %371 = vector.shape_cast %370 : vector<1x16x128xf32> to vector<16x128xf32>
    %372 = arith.mulf %371, %369 : vector<16x128xf32>
    %373 = vector.extract_strided_slice %326 {offsets = [7, 0, 0], sizes = [1, 16, 128], strides = [1, 1, 1]} : vector<8x16x128xf32> to vector<1x16x128xf32>
    %374 = vector.shape_cast %373 : vector<1x16x128xf32> to vector<16x128xf32>
    %375 = arith.addf %372, %374 : vector<16x128xf32>
    %376 = vector.shape_cast %333 : vector<16x128xf32> to vector<1x16x128xf32>
    %377 = vector.shape_cast %339 : vector<16x128xf32> to vector<1x16x128xf32>
    %378 = vector.shape_cast %345 : vector<16x128xf32> to vector<1x16x128xf32>
    %379 = vector.shape_cast %351 : vector<16x128xf32> to vector<1x16x128xf32>
    %380 = vector.shape_cast %357 : vector<16x128xf32> to vector<1x16x128xf32>
    %381 = vector.shape_cast %363 : vector<16x128xf32> to vector<1x16x128xf32>
    %382 = vector.shape_cast %369 : vector<16x128xf32> to vector<1x16x128xf32>
    %383 = vector.shape_cast %375 : vector<16x128xf32> to vector<1x16x128xf32>
    %384 = tpu.concatenate %376, %377, %378, %379, %380, %381, %382, %383 in 0 : vector<1x16x128xf32>, vector<1x16x128xf32>, vector<1x16x128xf32>, vector<1x16x128xf32>, vector<1x16x128xf32>, vector<1x16x128xf32>, vector<1x16x128xf32>, vector<1x16x128xf32> -> vector<8x16x128xf32>
    %385 = arith.mulf %384, %314 : vector<8x16x128xf32>
    %cst_91 = arith.constant dense<0.000000e+00> : vector<8x128xf32>
    %386 = vector.multi_reduction <add>, %385, %cst_91 [1] : vector<8x16x128xf32> to vector<8x128xf32>
    %c1_92 = arith.constant 1 : index
    %c0_93 = arith.constant 0 : index
    %c0_94 = arith.constant 0 : index
    %387 = vector.load %arg8[%c1_92, %c0_93, %c0_94] : memref<2x1x128xf32, #tpu.memory_space<vmem>>, vector<1x1x128xf32>
    %388 = vector.shape_cast %387 : vector<1x1x128xf32> to vector<1x128xf32>
    %389 = vector.broadcast %388 : vector<1x128xf32> to vector<8x128xf32>
    %390 = arith.mulf %282, %389 : vector<8x128xf32>
    %391 = arith.addf %386, %390 : vector<8x128xf32>
    %392 = arith.negf %240 : vector<8x128xf32>
    %393 = math.exp %392 : vector<8x128xf32>
    %cst_95 = arith.constant 1.000000e+00 : f32
    %394 = vector.broadcast %cst_95 : f32 to vector<8x128xf32>
    %395 = arith.addf %394, %393 : vector<8x128xf32>
    %396 = arith.divf %394, %395 : vector<8x128xf32>
    %397 = arith.mulf %240, %396 : vector<8x128xf32>
    %398 = arith.mulf %391, %397 : vector<8x128xf32>
    %399 = arith.truncf %398 : vector<8x128xf32> to vector<8x128xbf16>
    %c1_96 = arith.constant 1 : index
    %c0_97 = arith.constant 0 : index
    %c0_98 = arith.constant 0 : index
    %400 = vector.load %arg9[%c1_96, %c0_97, %c0_98] : memref<2x128x64xbf16, #tpu.memory_space<vmem>>, vector<1x128x64xbf16>
    %401 = vector.shape_cast %400 : vector<1x128x64xbf16> to vector<128x64xbf16>
    %cst_99 = arith.constant dense<0.000000e+00> : vector<8x64xf32>
    %402 = tpu.matmul %399, %401, %cst_99 {dimension_numbers = #tpu.dot_dimension_numbers<[1], [0], [0], [1], [0, 0, 1, 1], [], []>} : vector<8x128xbf16>, vector<128x64xbf16>, vector<8x64xf32> -> vector<8x64xf32>
    %403 = arith.addf %205, %402 : vector<8x64xf32>
    %c0_100 = arith.constant 0 : index
    %c0_101 = arith.constant 0 : index
    %404 = vector.load %arg10[%c0_100, %c0_101] : memref<1x64xf32, #tpu.memory_space<vmem>>, vector<1x64xf32>
    %405 = arith.mulf %403, %403 : vector<8x64xf32>
    %cst_102 = arith.constant 0.000000e+00 : f32
    %406 = vector.broadcast %cst_102 : f32 to vector<8x64xf32>
    %407 = arith.select %3, %405, %406 : vector<8x64xi1>, vector<8x64xf32>
    %cst_103 = arith.constant dense<0.000000e+00> : vector<8xf32>
    %408 = vector.multi_reduction <add>, %407, %cst_103 [1] : vector<8x64xf32> to vector<8xf32>
    %409 = vector.shape_cast %408 : vector<8xf32> to vector<8x1xf32>
    %cst_104 = arith.constant 0.000000e+00 : f32
    %410 = vector.broadcast %cst_104 : f32 to vector<8x64xf32>
    %411 = arith.select %3, %410, %405 : vector<8x64xi1>, vector<8x64xf32>
    %cst_105 = arith.constant dense<0.000000e+00> : vector<8xf32>
    %412 = vector.multi_reduction <add>, %411, %cst_105 [1] : vector<8x64xf32> to vector<8xf32>
    %413 = vector.shape_cast %412 : vector<8xf32> to vector<8x1xf32>
    %cst_106 = arith.constant 3.125000e-02 : f32
    %414 = vector.broadcast %cst_106 : f32 to vector<8x1xf32>
    %415 = arith.mulf %409, %414 : vector<8x1xf32>
    %cst_107 = arith.constant 9.99999974E-6 : f32
    %416 = vector.broadcast %cst_107 : f32 to vector<8x1xf32>
    %417 = arith.addf %415, %416 : vector<8x1xf32>
    %418 = math.rsqrt %417 : vector<8x1xf32>
    %cst_108 = arith.constant 3.125000e-02 : f32
    %419 = vector.broadcast %cst_108 : f32 to vector<8x1xf32>
    %420 = arith.mulf %413, %419 : vector<8x1xf32>
    %cst_109 = arith.constant 9.99999974E-6 : f32
    %421 = vector.broadcast %cst_109 : f32 to vector<8x1xf32>
    %422 = arith.addf %420, %421 : vector<8x1xf32>
    %423 = math.rsqrt %422 : vector<8x1xf32>
    %424 = vector.shape_cast %418 : vector<8x1xf32> to vector<8x1xf32>
    %425 = vector.broadcast %424 : vector<8x1xf32> to vector<8x64xf32>
    %426 = vector.shape_cast %423 : vector<8x1xf32> to vector<8x1xf32>
    %427 = vector.broadcast %426 : vector<8x1xf32> to vector<8x64xf32>
    %428 = arith.select %3, %425, %427 : vector<8x64xi1>, vector<8x64xf32>
    %429 = arith.mulf %403, %428 : vector<8x64xf32>
    %430 = vector.broadcast %404 : vector<1x64xf32> to vector<8x64xf32>
    %431 = arith.mulf %429, %430 : vector<8x64xf32>
    %432 = arith.truncf %431 : vector<8x64xf32> to vector<8x64xbf16>
    %c0_110 = arith.constant 0 : index
    %c0_111 = arith.constant 0 : index
    %433 = vector.load %arg11[%c0_110, %c0_111] : memref<64x256xbf16, #tpu.memory_space<vmem>>, vector<64x256xbf16>
    %cst_112 = arith.constant dense<0.000000e+00> : vector<8x256xf32>
    %434 = tpu.matmul %432, %433, %cst_112 {dimension_numbers = #tpu.dot_dimension_numbers<[1], [0], [0], [1], [0, 0, 1, 1], [], []>} : vector<8x64xbf16>, vector<64x256xbf16>, vector<8x256xf32> -> vector<8x256xf32>
    %435 = vector.extract_strided_slice %434 {offsets = [0, 0], sizes = [8, 128], strides = [1, 1]} : vector<8x256xf32> to vector<8x128xf32>
    %c0_113 = arith.constant 0 : index
    %c0_114 = arith.constant 0 : index
    %c0_115 = arith.constant 0 : index
    %436 = vector.load %arg12[%c0_113, %c0_114, %c0_115] : memref<2x8x128xf32, #tpu.memory_space<vmem>>, vector<1x8x128xf32>
    %437 = vector.shape_cast %436 : vector<1x8x128xf32> to vector<8x128xf32>
    %438 = vector.shape_cast %435 : vector<8x128xf32> to vector<1x8x128xf32>
    tpu.vector_store %arg12[%c0_113, %c0_114, %c0_115], %438 {strides = array<i32>} : memref<2x8x128xf32, #tpu.memory_space<vmem>>, vector<1x8x128xf32>,
    %439 = vector.extract_strided_slice %434 {offsets = [0, 128], sizes = [8, 128], strides = [1, 1]} : vector<8x256xf32> to vector<8x128xf32>
    %c1_116 = arith.constant 1 : index
    %c0_117 = arith.constant 0 : index
    %c0_118 = arith.constant 0 : index
    %440 = vector.load %arg12[%c1_116, %c0_117, %c0_118] : memref<2x8x128xf32, #tpu.memory_space<vmem>>, vector<1x8x128xf32>
    %441 = vector.shape_cast %440 : vector<1x8x128xf32> to vector<8x128xf32>
    %442 = vector.shape_cast %439 : vector<8x128xf32> to vector<1x8x128xf32>
    tpu.vector_store %arg12[%c1_116, %c0_117, %c0_118], %442 {strides = array<i32>} : memref<2x8x128xf32, #tpu.memory_space<vmem>>, vector<1x8x128xf32>,
    return
  }
}

</mosaic_0001>

<llo_original>
// kernel: mamba_forward.1
$region0: #{mamba_forward.1}
  #allocation0 [shape = 'u32[]', space=smem, size = 0x4, offset = 0x4, fixed_abs, tag = 'smem constant byte address 0x4 - core index']
  #allocation1 [shape = 'u32[72,128]{1,0:T(1,128)}', space=vmem, size = 0x9000, scoped, tag = 'internal scratch']
  %s0 = inlined_call_operand.vmem [shape: f32[8,64], index: 0, kind: input, shape index: {}]
  %s1 = inlined_call_operand.vmem [shape: f32[2,1,64], index: 1, kind: input, shape index: {}]
  %s2 = inlined_call_operand.vmem [shape: bf16[2,64,256], index: 2, kind: input, shape index: {}]
  %s3 = inlined_call_operand.vmem [shape: f32[2,4,128], index: 3, kind: input, shape index: {}]
  %s4 = inlined_call_operand.vmem [shape: f32[2,1,128], index: 4, kind: input, shape index: {}]
  %s5 = inlined_call_operand.vmem [shape: bf16[2,128,256], index: 5, kind: input, shape index: {}]
  %s6 = inlined_call_operand.vmem [shape: f32[2,1,128], index: 6, kind: input, shape index: {}]
  %s7 = inlined_call_operand.vmem [shape: f32[2,16,128], index: 7, kind: input, shape index: {}]
  %s8 = inlined_call_operand.vmem [shape: f32[2,1,128], index: 8, kind: input, shape index: {}]
  %s9 = inlined_call_operand.vmem [shape: bf16[2,128,64], index: 9, kind: input, shape index: {}]
  %s10 = inlined_call_operand.vmem [shape: f32[1,64], index: 10, kind: input, shape index: {}]
  %s11 = inlined_call_operand.vmem [shape: bf16[64,256], index: 11, kind: input, shape index: {}]
  %s12 = inlined_call_operand.hbm [shape: f32[2,8,128], index: 12, kind: output, shape index: {}]
  %s13 = sld [smem:[#allocation0]]
  $region58: #{mamba_forward.1} parent=0
    _
  %s15 = ssub.s32 1, %s13
  %s16 = scalar_select 0, %s15, %s13
  $region1: #{mamba_forward.1} parent=0
    #allocation2 [shape = 'u8[8192]{0}', space=vmem, size = 0x2000, scoped, tag = 'output window, operand 0, single buffered']
    #allocation3 [shape = 's32[1]{0}', space=sflag, size = 0x4, scoped, tag = 'scoped memory for mamba_forward.1']
    %17 = vsyncpa [#allocation3], 0
    // Predicated region
    $region2: #{mamba_forward.1} parent=1 // pred_check
      _
    $region3: #{mamba_forward.1} parent=1 // pred_check_branch
      %19 = sbr.rel (0) target = $region5
    $region4: #{mamba_forward.1} parent=1 // pred_region
      _
    $region5: #{mamba_forward.1} parent=1 // pred_fallthru
      _
    // Predicated region
    $region6: #{mamba_forward.1} parent=1 // pred_check
      _
    $region7: #{mamba_forward.1} parent=1 // pred_check_branch
      %21 = sbr.rel (0) target = $region9
    $region8: #{mamba_forward.1} parent=1 // pred_region
      _
    $region9: #{mamba_forward.1} parent=1 // pred_fallthru
      _
    // Predicated region
    $region10: #{mamba_forward.1} parent=1 // pred_check
      _
    $region11: #{mamba_forward.1} parent=1 // pred_check_branch
      %23 = sbr.rel (0) target = $region13
    $region12: #{mamba_forward.1} parent=1 // pred_region
      _
    $region13: #{mamba_forward.1} parent=1 // pred_fallthru
      _
    // Predicated region
    $region14: #{mamba_forward.1} parent=1 // pred_check
      _
    $region15: #{mamba_forward.1} parent=1 // pred_check_branch
      %25 = sbr.rel (0) target = $region17
    $region16: #{mamba_forward.1} parent=1 // pred_region
      _
    $region17: #{mamba_forward.1} parent=1 // pred_fallthru
      _
    // Predicated region
    $region18: #{mamba_forward.1} parent=1 // pred_check
      _
    $region19: #{mamba_forward.1} parent=1 // pred_check_branch
      %27 = sbr.rel (0) target = $region21
    $region20: #{mamba_forward.1} parent=1 // pred_region
      _
    $region21: #{mamba_forward.1} parent=1 // pred_fallthru
      _
    // Predicated region
    $region22: #{mamba_forward.1} parent=1 // pred_check
      _
    $region23: #{mamba_forward.1} parent=1 // pred_check_branch
      %29 = sbr.rel (0) target = $region25
    $region24: #{mamba_forward.1} parent=1 // pred_region
      _
    $region25: #{mamba_forward.1} parent=1 // pred_fallthru
      _
    // Predicated region
    $region26: #{mamba_forward.1} parent=1 // pred_check
      _
    $region27: #{mamba_forward.1} parent=1 // pred_check_branch
      %31 = sbr.rel (0) target = $region29
    $region28: #{mamba_forward.1} parent=1 // pred_region
      _
    $region29: #{mamba_forward.1} parent=1 // pred_fallthru
      _
    // Predicated region
    $region30: #{mamba_forward.1} parent=1 // pred_check
      _
    $region31: #{mamba_forward.1} parent=1 // pred_check_branch
      %33 = sbr.rel (0) target = $region33
    $region32: #{mamba_forward.1} parent=1 // pred_region
      _
    $region33: #{mamba_forward.1} parent=1 // pred_fallthru
      _
    // Predicated region
    $region34: #{mamba_forward.1} parent=1 // pred_check
      _
    $region35: #{mamba_forward.1} parent=1 // pred_check_branch
      %35 = sbr.rel (0) target = $region37
    $region36: #{mamba_forward.1} parent=1 // pred_region
      _
    $region37: #{mamba_forward.1} parent=1 // pred_fallthru
      _
    // Predicated region
    $region38: #{mamba_forward.1} parent=1 // pred_check
      _
    $region39: #{mamba_forward.1} parent=1 // pred_check_branch
      %37 = sbr.rel (0) target = $region41
    $region40: #{mamba_forward.1} parent=1 // pred_region
      _
    $region41: #{mamba_forward.1} parent=1 // pred_fallthru
      _
    // Predicated region
    $region42: #{mamba_forward.1} parent=1 // pred_check
      _
    $region43: #{mamba_forward.1} parent=1 // pred_check_branch
      %39 = sbr.rel (0) target = $region45
    $region44: #{mamba_forward.1} parent=1 // pred_region
      _
    $region45: #{mamba_forward.1} parent=1 // pred_fallthru
      _
    // Predicated region
    $region46: #{mamba_forward.1} parent=1 // pred_check
      _
    $region47: #{mamba_forward.1} parent=1 // pred_check_branch
      %41 = sbr.rel (0) target = $region49
    $region48: #{mamba_forward.1} parent=1 // pred_region
      _
    $region49: #{mamba_forward.1} parent=1 // pred_fallthru
      _
    %v43 = vld [vmem:[%s0] sm:$0xff]
    %v44 = vlaneseq
    %v45 = vand.u32 %v44, 127
    %vm46 = vcmp.lt.s32.totalorder %v45, 32
    %v47 = vlaneseq
    %v48 = vshrl.u32 %v47, 7
    %vm49 = vcmp.lt.s32.totalorder %v45, 64
    %v50 = vld [vmem:[%s1] sm:$0x1]
    %v51 = vmul.f32 %v43, %v43
    %v52 = vsel %vm46, %v51, 0.0
    %vm53 = vcmask 523264
    %v54 = vsel %vm53, %v52, 0.0
    %55 = vadd.xlane.f32.xlu0 %v54
    %v56 = vpop.xlane.xlu0 %55
    %v57 = vsel %vm46, 0.0, %v51
    %v58 = vsel %vm53, %v57, 0.0
    %59 = vadd.xlane.f32.xlu0 %v58
    %v60 = vpop.xlane.xlu0 %59
    %v61 = vmul.f32 %v56, 0.03125
    %v62 = vadd.f32 %v61, 1e-05
    %v63 = vrsqrt.pop %v62
    %v64 = vmul.f32 %v63, %v62
    %v65 = vmul.f32 %v64, %v63
    %v66 = vmul.f32 0.5, %v65
    %v67 = vsub.f32 1.5, %v66
    %v68 = vmul.f32 %v63, %v67
    %vm69 = vweird.f32 %v62
    %vm70 = vweird.f32 %v63
    %vm71 = vmor %vm69, %vm70
    %v72 = vsel %vm71, %v63, %v68
    %v73 = vmul.f32 %v60, 0.03125
    %v74 = vadd.f32 %v73, 1e-05
    %v75 = vrsqrt.pop %v74
    %v76 = vmul.f32 %v75, %v74
    %v77 = vmul.f32 %v76, %v75
    %v78 = vmul.f32 0.5, %v77
    %v79 = vsub.f32 1.5, %v78
    %v80 = vmul.f32 %v75, %v79
    %vm81 = vweird.f32 %v74
    %vm82 = vweird.f32 %v75
    %vm83 = vmor %vm81, %vm82
    %v84 = vsel %vm83, %v75, %v80
    %v85 = vsel %vm46, %v72, %v84
    %v86 = vmul.f32 %v43, %v85
    %v88 = vperm.slane %v50, 0
    %v90 = vmul.f32 %v86, %v88
    %v91 = vpack.c.bf16 %v90, %v90
    %v92 = vld [vmem:[%s2] sm:$0xff]
    %v93 = vld [vmem:[%s2 + $0x8] sm:$0xff]
    %v94 = vld [vmem:[%s2 + $0x10] sm:$0xff]
    %v95 = vld [vmem:[%s2 + $0x18] sm:$0xff]
    %v96 = vld [vmem:[%s2 + $0x20] sm:$0xff]
    %v97 = vld [vmem:[%s2 + $0x28] sm:$0xff]
    %v98 = vld [vmem:[%s2 + $0x30] sm:$0xff]
    %v99 = vld [vmem:[%s2 + $0x38] sm:$0xff]
    %v108 = vunpack.c.l.b16 %v92
    %v109 = vunpack.c.h.b16 %v92
    %v110 = vunpack.c.l.b16 %v93
    %v111 = vunpack.c.h.b16 %v93
    %v112 = vunpack.c.l.b16 %v94
    %v113 = vunpack.c.h.b16 %v94
    %v114 = vunpack.c.l.b16 %v95
    %v115 = vunpack.c.h.b16 %v95
    %v116 = vunpack.c.l.b16 %v96
    %v117 = vunpack.c.h.b16 %v96
    %v118 = vunpack.c.l.b16 %v97
    %v119 = vunpack.c.h.b16 %v97
    %v120 = vunpack.c.l.b16 %v98
    %v121 = vunpack.c.h.b16 %v98
    %v122 = vunpack.c.l.b16 %v99
    %v123 = vunpack.c.h.b16 %v99
    %v124 = vpack.c.b16 %v110, %v108
    %v125 = vpack.c.b16 %v111, %v109
    %v126 = vpack.c.b16 %v114, %v112
    %v127 = vpack.c.b16 %v115, %v113
    %v128 = vpack.c.b16 %v118, %v116
    %v129 = vpack.c.b16 %v119, %v117
    %v130 = vpack.c.b16 %v122, %v120
    %v131 = vpack.c.b16 %v123, %v121
    %v141 = vsel %vm53, %v91, 0
    %143 = vmatpush.bf16.msra.mxu0 0
    %144 = vmatpush.bf16.msra.mxu0 0
    %145 = vmatpush.bf16.msra.mxu0 0
    %146 = vmatpush.bf16.msra.mxu0 0
    %147 = vmatpush.bf16.msra.mxu0 %v130
    %148 = vmatpush.bf16.msra.mxu0 %v128
    %149 = vmatpush.bf16.msra.mxu0 %v126
    %150 = vmatpush.bf16.msra.mxu0 %v124
    %151 = vmatmul.bf16.gmra.mxu0 %v141
    %v152 = vpop.f32.mrf.mxu0
    %v153 = vadd.f32 0.0, %v152
    %v154 = vpop.f32.mrf.mxu0
    %155 = vdwg.mxu0
    %156 = vmatpush.bf16.msra.mxu0 0
    %157 = vmatpush.bf16.msra.mxu0 0
    %158 = vmatpush.bf16.msra.mxu0 0
    %159 = vmatpush.bf16.msra.mxu0 0
    %160 = vmatpush.bf16.msra.mxu0 %v131
    %161 = vmatpush.bf16.msra.mxu0 %v129
    %162 = vmatpush.bf16.msra.mxu0 %v127
    %163 = vmatpush.bf16.msra.mxu0 %v125
    %164 = vmatmul.bf16.gmra.mxu0 %v141
    %v165 = vpop.f32.mrf.mxu0
    %v166 = vadd.f32 0.0, %v165
    %v167 = vpop.f32.mrf.mxu0
    %168 = vdwg.mxu0
    %v169 = vld [vmem:[%s3] sm:$0xf]
    %v170 = vld [vmem:[%s4] sm:$0x1]
    %v171 = vperm.slane %v169, 3
    %v172 = vmul.f32 %v153, %v171
    %v174 = vperm.slane %v170, 0
    %v176 = vadd.f32 %v174, %v172
    %v177 = vrot.slane %v153, 7
    %vm178 = vcmp.ge.s32.totalorder %v48, 1
    %v179 = vsel %vm178, %v177, 0.0
    %v180 = vperm.slane %v169, 2
    %v181 = vmul.f32 %v179, %v180
    %v182 = vadd.f32 %v176, %v181
    %v183 = vrot.slane %v153, 6
    %vm184 = vcmp.ge.s32.totalorder %v48, 2
    %v185 = vsel %vm184, %v183, 0.0
    %v186 = vperm.slane %v169, 1
    %v187 = vmul.f32 %v185, %v186
    %v188 = vadd.f32 %v182, %v187
    %v189 = vrot.slane %v153, 5
    %vm190 = vcmp.ge.s32.totalorder %v48, 3
    %v191 = vsel %vm190, %v189, 0.0
    %v192 = vperm.slane %v169, 0
    %v193 = vmul.f32 %v191, %v192
    %v194 = vadd.f32 %v188, %v193
    %v195 = vxor.u32 %v194, 2147483648
    %v196 = vmul.f32 %v195, 1.442695
    %v197 = vpow.pop %v196
    %v198 = vadd.f32 %v197, 1.0
    %v199 = vrcp.pop %v198
    %v200 = vmul.f32 %v198, %v199
    %v201 = vsub.f32 1.0, %v200
    %v202 = vmul.f32 %v199, %v201
    %v203 = vadd.f32 %v199, %v202
    %vm204 = vweird.f32 %v198
    %vm205 = vweird.f32 %v199
    %vm206 = vmor %vm204, %vm205
    %v207 = vsel %vm206, %v199, %v203
    %v208 = vand.u32 2147483647, %v198
    %vm209 = vcmp.eq.f32.partialorder %v208, 8.507059e+37
    %v210 = vand.u32 %v198, 2147483648
    %v211 = vor.u32 1.1754944e-38, %v210
    %v212 = vsel %vm209, %v211, %v207
    %v213 = vmul.f32 1.0, %v212
    %v214 = vmul.f32 %v194, %v213
    %v215 = vpack.c.bf16 %v214, %v214
    %v216 = vld [vmem:[%s5] sm:$0xff]
    %v217 = vld [vmem:[%s5 + $0x8] sm:$0xff]
    %v218 = vld [vmem:[%s5 + $0x10] sm:$0xff]
    %v219 = vld [vmem:[%s5 + $0x18] sm:$0xff]
    %v220 = vld [vmem:[%s5 + $0x20] sm:$0xff]
    %v221 = vld [vmem:[%s5 + $0x28] sm:$0xff]
    %v222 = vld [vmem:[%s5 + $0x30] sm:$0xff]
    %v223 = vld [vmem:[%s5 + $0x38] sm:$0xff]
    %v224 = vld [vmem:[%s5 + $0x40] sm:$0xff]
    %v225 = vld [vmem:[%s5 + $0x48] sm:$0xff]
    %v226 = vld [vmem:[%s5 + $0x50] sm:$0xff]
    %v227 = vld [vmem:[%s5 + $0x58] sm:$0xff]
    %v228 = vld [vmem:[%s5 + $0x60] sm:$0xff]
    %v229 = vld [vmem:[%s5 + $0x68] sm:$0xff]
    %v230 = vld [vmem:[%s5 + $0x70] sm:$0xff]
    %v231 = vld [vmem:[%s5 + $0x78] sm:$0xff]
    %v248 = vunpack.c.l.b16 %v216
    %v249 = vunpack.c.h.b16 %v216
    %v250 = vunpack.c.l.b16 %v217
    %v251 = vunpack.c.h.b16 %v217
    %v252 = vunpack.c.l.b16 %v218
    %v253 = vunpack.c.h.b16 %v218
    %v254 = vunpack.c.l.b16 %v219
    %v255 = vunpack.c.h.b16 %v219
    %v256 = vunpack.c.l.b16 %v220
    %v257 = vunpack.c.h.b16 %v220
    %v258 = vunpack.c.l.b16 %v221
    %v259 = vunpack.c.h.b16 %v221
    %v260 = vunpack.c.l.b16 %v222
    %v261 = vunpack.c.h.b16 %v222
    %v262 = vunpack.c.l.b16 %v223
    %v263 = vunpack.c.h.b16 %v223
    %v264 = vunpack.c.l.b16 %v224
    %v265 = vunpack.c.h.b16 %v224
    %v266 = vunpack.c.l.b16 %v225
    %v267 = vunpack.c.h.b16 %v225
    %v268 = vunpack.c.l.b16 %v226
    %v269 = vunpack.c.h.b16 %v226
    %v270 = vunpack.c.l.b16 %v227
    %v271 = vunpack.c.h.b16 %v227
    %v272 = vunpack.c.l.b16 %v228
    %v273 = vunpack.c.h.b16 %v228
    %v274 = vunpack.c.l.b16 %v229
    %v275 = vunpack.c.h.b16 %v229
    %v276 = vunpack.c.l.b16 %v230
    %v277 = vunpack.c.h.b16 %v230
    %v278 = vunpack.c.l.b16 %v231
    %v279 = vunpack.c.h.b16 %v231
    %v280 = vpack.c.b16 %v250, %v248
    %v281 = vpack.c.b16 %v251, %v249
    %v282 = vpack.c.b16 %v254, %v252
    %v283 = vpack.c.b16 %v255, %v253
    %v284 = vpack.c.b16 %v258, %v256
    %v285 = vpack.c.b16 %v259, %v257
    %v286 = vpack.c.b16 %v262, %v260
    %v287 = vpack.c.b16 %v263, %v261
    %v288 = vpack.c.b16 %v266, %v264
    %v289 = vpack.c.b16 %v267, %v265
    %v290 = vpack.c.b16 %v270, %v268
    %v291 = vpack.c.b16 %v271, %v269
    %v292 = vpack.c.b16 %v274, %v272
    %v293 = vpack.c.b16 %v275, %v273
    %v294 = vpack.c.b16 %v278, %v276
    %v295 = vpack.c.b16 %v279, %v277
    %312 = vmatpush.bf16.msra.mxu0 %v294
    %313 = vmatpush.bf16.msra.mxu0 %v292
    %314 = vmatpush.bf16.msra.mxu0 %v290
    %315 = vmatpush.bf16.msra.mxu0 %v288
    %316 = vmatpush.bf16.msra.mxu0 %v286
    %317 = vmatpush.bf16.msra.mxu0 %v284
    %318 = vmatpush.bf16.msra.mxu0 %v282
    %319 = vmatpush.bf16.msra.mxu0 %v280
    %320 = vmatmul.bf16.gmra.mxu0 %v215
    %v321 = vpop.f32.mrf.mxu0
    %v322 = vadd.f32 0.0, %v321
    %v323 = vpop.f32.mrf.mxu0
    %324 = vdwg.mxu0
    %325 = vmatpush.bf16.msra.mxu0 %v295
    %326 = vmatpush.bf16.msra.mxu0 %v293
    %327 = vmatpush.bf16.msra.mxu0 %v291
    %328 = vmatpush.bf16.msra.mxu0 %v289
    %329 = vmatpush.bf16.msra.mxu0 %v287
    %330 = vmatpush.bf16.msra.mxu0 %v285
    %331 = vmatpush.bf16.msra.mxu0 %v283
    %332 = vmatpush.bf16.msra.mxu0 %v281
    %333 = vmatmul.bf16.gmra.mxu0 %v215
    %v334 = vpop.f32.mrf.mxu0
    %v335 = vadd.f32 0.0, %v334
    %v336 = vpop.f32.mrf.mxu0
    %337 = vdwg.mxu0
    %v338 = vld [vmem:[%s6] sm:$0x1]
    %v340 = vperm.slane %v338, 0
    %v342 = vadd.f32 %v322, %v340
    %vm343 = vcmp.gt.f32.partialorder %v342, 20.0
    %v344 = vmul.f32 %v342, 1.442695
    %v345 = vpow.pop %v344
    %v346 = vadd.f32 %v345, 1.0
    %v347 = vlog2.pop %v346
    %v348 = vmul.f32 %v347, 0.6931472
    %v349 = vmul.f32 -0.5, %v345
    %v350 = vadd.f32 %v349, 1.0
    %v351 = vmul.f32 %v350, %v345
    %v352 = vand.u32 2147483647, %v345
    %vm353 = vcmp.lt.f32.partialorder %v352, 0.0004427343
    %v354 = vsel %vm353, %v351, %v348
    %v355 = vsel %vm343, %v342, %v354
    %v356 = vperm.slane %v335, 0
    %v357 = vlaneseq
    %v358 = vshrl.u32 %v357, 7
    %360 = vset.pattern.permute.xlu0 %v358
    %361 = vperm.xlu0 %360, %v356
    %v362 = vpop.permute.xlu0 %361
    %v363 = vlaneseq
    %v364 = vshrl.u32 %v363, 7
    %v365 = vadd.s32 %v364, 8
    %366 = vset.pattern.permute.xlu0 %v365
    %367 = vperm.xlu0 %366, %v356
    %v368 = vpop.permute.xlu0 %367
    %v369 = vperm.slane %v335, 1
    %v370 = vlaneseq
    %v371 = vshrl.u32 %v370, 7
    %373 = vset.pattern.permute.xlu0 %v371
    %374 = vperm.xlu0 %373, %v369
    %v375 = vpop.permute.xlu0 %374
    %v376 = vlaneseq
    %v377 = vshrl.u32 %v376, 7
    %v378 = vadd.s32 %v377, 8
    %379 = vset.pattern.permute.xlu0 %v378
    %380 = vperm.xlu0 %379, %v369
    %v381 = vpop.permute.xlu0 %380
    %v382 = vperm.slane %v335, 2
    %v383 = vlaneseq
    %v384 = vshrl.u32 %v383, 7
    %386 = vset.pattern.permute.xlu0 %v384
    %387 = vperm.xlu0 %386, %v382
    %v388 = vpop.permute.xlu0 %387
    %v389 = vlaneseq
    %v390 = vshrl.u32 %v389, 7
    %v391 = vadd.s32 %v390, 8
    %392 = vset.pattern.permute.xlu0 %v391
    %393 = vperm.xlu0 %392, %v382
    %v394 = vpop.permute.xlu0 %393
    %v395 = vperm.slane %v335, 3
    %v396 = vlaneseq
    %v397 = vshrl.u32 %v396, 7
    %399 = vset.pattern.permute.xlu0 %v397
    %400 = vperm.xlu0 %399, %v395
    %v401 = vpop.permute.xlu0 %400
    %v402 = vlaneseq
    %v403 = vshrl.u32 %v402, 7
    %v404 = vadd.s32 %v403, 8
    %405 = vset.pattern.permute.xlu0 %v404
    %406 = vperm.xlu0 %405, %v395
    %v407 = vpop.permute.xlu0 %406
    %v408 = vperm.slane %v335, 4
    %v409 = vlaneseq
    %v410 = vshrl.u32 %v409, 7
    %412 = vset.pattern.permute.xlu0 %v410
    %413 = vperm.xlu0 %412, %v408
    %v414 = vpop.permute.xlu0 %413
    %v415 = vlaneseq
    %v416 = vshrl.u32 %v415, 7
    %v417 = vadd.s32 %v416, 8
    %418 = vset.pattern.permute.xlu0 %v417
    %419 = vperm.xlu0 %418, %v408
    %v420 = vpop.permute.xlu0 %419
    %v421 = vperm.slane %v335, 5
    %v422 = vlaneseq
    %v423 = vshrl.u32 %v422, 7
    %425 = vset.pattern.permute.xlu0 %v423
    %426 = vperm.xlu0 %425, %v421
    %v427 = vpop.permute.xlu0 %426
    %v428 = vlaneseq
    %v429 = vshrl.u32 %v428, 7
    %v430 = vadd.s32 %v429, 8
    %431 = vset.pattern.permute.xlu0 %v430
    %432 = vperm.xlu0 %431, %v421
    %v433 = vpop.permute.xlu0 %432
    %v434 = vperm.slane %v335, 6
    %v435 = vlaneseq
    %v436 = vshrl.u32 %v435, 7
    %438 = vset.pattern.permute.xlu0 %v436
    %439 = vperm.xlu0 %438, %v434
    %v440 = vpop.permute.xlu0 %439
    %v441 = vlaneseq
    %v442 = vshrl.u32 %v441, 7
    %v443 = vadd.s32 %v442, 8
    %444 = vset.pattern.permute.xlu0 %v443
    %445 = vperm.xlu0 %444, %v434
    %v446 = vpop.permute.xlu0 %445
    %v447 = vperm.slane %v335, 7
    %v448 = vlaneseq
    %v449 = vshrl.u32 %v448, 7
    %451 = vset.pattern.permute.xlu0 %v449
    %452 = vperm.xlu0 %451, %v447
    %v453 = vpop.permute.xlu0 %452
    %v454 = vlaneseq
    %v455 = vshrl.u32 %v454, 7
    %v456 = vadd.s32 %v455, 8
    %457 = vset.pattern.permute.xlu0 %v456
    %458 = vperm.xlu0 %457, %v447
    %v459 = vpop.permute.xlu0 %458
    %v460 = vlaneseq
    %v461 = vshrl.u32 %v460, 7
    %v462 = vadd.s32 %v461, 32
    %463 = vset.pattern.permute.xlu0 %v462
    %464 = vperm.xlu0 %463, %v356
    %v465 = vpop.permute.xlu0 %464
    %v466 = vlaneseq
    %v467 = vshrl.u32 %v466, 7
    %v468 = vadd.s32 %v467, 40
    %469 = vset.pattern.permute.xlu0 %v468
    %470 = vperm.xlu0 %469, %v356
    %v471 = vpop.permute.xlu0 %470
    %v472 = vlaneseq
    %v473 = vshrl.u32 %v472, 7
    %v474 = vadd.s32 %v473, 32
    %475 = vset.pattern.permute.xlu0 %v474
    %476 = vperm.xlu0 %475, %v369
    %v477 = vpop.permute.xlu0 %476
    %v478 = vlaneseq
    %v479 = vshrl.u32 %v478, 7
    %v480 = vadd.s32 %v479, 40
    %481 = vset.pattern.permute.xlu0 %v480
    %482 = vperm.xlu0 %481, %v369
    %v483 = vpop.permute.xlu0 %482
    %v484 = vlaneseq
    %v485 = vshrl.u32 %v484, 7
    %v486 = vadd.s32 %v485, 32
    %487 = vset.pattern.permute.xlu0 %v486
    %488 = vperm.xlu0 %487, %v382
    %v489 = vpop.permute.xlu0 %488
    %v490 = vlaneseq
    %v491 = vshrl.u32 %v490, 7
    %v492 = vadd.s32 %v491, 40
    %493 = vset.pattern.permute.xlu0 %v492
    %494 = vperm.xlu0 %493, %v382
    %v495 = vpop.permute.xlu0 %494
    %v496 = vlaneseq
    %v497 = vshrl.u32 %v496, 7
    %v498 = vadd.s32 %v497, 32
    %499 = vset.pattern.permute.xlu0 %v498
    %500 = vperm.xlu0 %499, %v395
    %v501 = vpop.permute.xlu0 %500
    %v502 = vlaneseq
    %v503 = vshrl.u32 %v502, 7
    %v504 = vadd.s32 %v503, 40
    %505 = vset.pattern.permute.xlu0 %v504
    %506 = vperm.xlu0 %505, %v395
    %v507 = vpop.permute.xlu0 %506
    %v508 = vlaneseq
    %v509 = vshrl.u32 %v508, 7
    %v510 = vadd.s32 %v509, 32
    %511 = vset.pattern.permute.xlu0 %v510
    %512 = vperm.xlu0 %511, %v408
    %v513 = vpop.permute.xlu0 %512
    %v514 = vlaneseq
    %v515 = vshrl.u32 %v514, 7
    %v516 = vadd.s32 %v515, 40
    %517 = vset.pattern.permute.xlu0 %v516
    %518 = vperm.xlu0 %517, %v408
    %v519 = vpop.permute.xlu0 %518
    %v520 = vlaneseq
    %v521 = vshrl.u32 %v520, 7
    %v522 = vadd.s32 %v521, 32
    %523 = vset.pattern.permute.xlu0 %v522
    %524 = vperm.xlu0 %523, %v421
    %v525 = vpop.permute.xlu0 %524
    %v526 = vlaneseq
    %v527 = vshrl.u32 %v526, 7
    %v528 = vadd.s32 %v527, 40
    %529 = vset.pattern.permute.xlu0 %v528
    %530 = vperm.xlu0 %529, %v421
    %v531 = vpop.permute.xlu0 %530
    %v532 = vlaneseq
    %v533 = vshrl.u32 %v532, 7
    %v534 = vadd.s32 %v533, 32
    %535 = vset.pattern.permute.xlu0 %v534
    %536 = vperm.xlu0 %535, %v434
    %v537 = vpop.permute.xlu0 %536
    %v538 = vlaneseq
    %v539 = vshrl.u32 %v538, 7
    %v540 = vadd.s32 %v539, 40
    %541 = vset.pattern.permute.xlu0 %v540
    %542 = vperm.xlu0 %541, %v434
    %v543 = vpop.permute.xlu0 %542
    %v544 = vlaneseq
    %v545 = vshrl.u32 %v544, 7
    %v546 = vadd.s32 %v545, 32
    %547 = vset.pattern.permute.xlu0 %v546
    %548 = vperm.xlu0 %547, %v447
    %v549 = vpop.permute.xlu0 %548
    %v550 = vlaneseq
    %v551 = vshrl.u32 %v550, 7
    %v552 = vadd.s32 %v551, 40
    %553 = vset.pattern.permute.xlu0 %v552
    %554 = vperm.xlu0 %553, %v447
    %v555 = vpop.permute.xlu0 %554
    %v556 = vsel %vm49, %v362, %v465
    %v557 = vsel %vm49, %v368, %v471
    %v558 = vsel %vm49, %v375, %v477
    %v559 = vsel %vm49, %v381, %v483
    %v560 = vsel %vm49, %v388, %v489
    %v561 = vsel %vm49, %v394, %v495
    %v562 = vsel %vm49, %v401, %v501
    %v563 = vsel %vm49, %v407, %v507
    %v564 = vsel %vm49, %v414, %v513
    %v565 = vsel %vm49, %v420, %v519
    %v566 = vsel %vm49, %v427, %v525
    %v567 = vsel %vm49, %v433, %v531
    %v568 = vsel %vm49, %v440, %v537
    %v569 = vsel %vm49, %v446, %v543
    %v570 = vsel %vm49, %v453, %v549
    %v571 = vsel %vm49, %v459, %v555
    %v572 = vlaneseq
    %v573 = vshrl.u32 %v572, 7
    %v574 = vadd.s32 %v573, 16
    %575 = vset.pattern.permute.xlu0 %v574
    %576 = vperm.xlu0 %575, %v356
    %v577 = vpop.permute.xlu0 %576
    %v578 = vlaneseq
    %v579 = vshrl.u32 %v578, 7
    %v580 = vadd.s32 %v579, 24
    %581 = vset.pattern.permute.xlu0 %v580
    %582 = vperm.xlu0 %581, %v356
    %v583 = vpop.permute.xlu0 %582
    %v584 = vlaneseq
    %v585 = vshrl.u32 %v584, 7
    %v586 = vadd.s32 %v585, 16
    %587 = vset.pattern.permute.xlu0 %v586
    %588 = vperm.xlu0 %587, %v369
    %v589 = vpop.permute.xlu0 %588
    %v590 = vlaneseq
    %v591 = vshrl.u32 %v590, 7
    %v592 = vadd.s32 %v591, 24
    %593 = vset.pattern.permute.xlu0 %v592
    %594 = vperm.xlu0 %593, %v369
    %v595 = vpop.permute.xlu0 %594
    %v596 = vlaneseq
    %v597 = vshrl.u32 %v596, 7
    %v598 = vadd.s32 %v597, 16
    %599 = vset.pattern.permute.xlu0 %v598
    %600 = vperm.xlu0 %599, %v382
    %v601 = vpop.permute.xlu0 %600
    %v602 = vlaneseq
    %v603 = vshrl.u32 %v602, 7
    %v604 = vadd.s32 %v603, 24
    %605 = vset.pattern.permute.xlu0 %v604
    %606 = vperm.xlu0 %605, %v382
    %v607 = vpop.permute.xlu0 %606
    %v608 = vlaneseq
    %v609 = vshrl.u32 %v608, 7
    %v610 = vadd.s32 %v609, 16
    %611 = vset.pattern.permute.xlu0 %v610
    %612 = vperm.xlu0 %611, %v395
    %v613 = vpop.permute.xlu0 %612
    %v614 = vlaneseq
    %v615 = vshrl.u32 %v614, 7
    %v616 = vadd.s32 %v615, 24
    %617 = vset.pattern.permute.xlu0 %v616
    %618 = vperm.xlu0 %617, %v395
    %v619 = vpop.permute.xlu0 %618
    %v620 = vlaneseq
    %v621 = vshrl.u32 %v620, 7
    %v622 = vadd.s32 %v621, 16
    %623 = vset.pattern.permute.xlu0 %v622
    %624 = vperm.xlu0 %623, %v408
    %v625 = vpop.permute.xlu0 %624
    %v626 = vlaneseq
    %v627 = vshrl.u32 %v626, 7
    %v628 = vadd.s32 %v627, 24
    %629 = vset.pattern.permute.xlu0 %v628
    %630 = vperm.xlu0 %629, %v408
    %v631 = vpop.permute.xlu0 %630
    %v632 = vlaneseq
    %v633 = vshrl.u32 %v632, 7
    %v634 = vadd.s32 %v633, 16
    %635 = vset.pattern.permute.xlu0 %v634
    %636 = vperm.xlu0 %635, %v421
    %v637 = vpop.permute.xlu0 %636
    %v638 = vlaneseq
    %v639 = vshrl.u32 %v638, 7
    %v640 = vadd.s32 %v639, 24
    %641 = vset.pattern.permute.xlu0 %v640
    %642 = vperm.xlu0 %641, %v421
    %v643 = vpop.permute.xlu0 %642
    %v644 = vlaneseq
    %v645 = vshrl.u32 %v644, 7
    %v646 = vadd.s32 %v645, 16
    %647 = vset.pattern.permute.xlu0 %v646
    %648 = vperm.xlu0 %647, %v434
    %v649 = vpop.permute.xlu0 %648
    %v650 = vlaneseq
    %v651 = vshrl.u32 %v650, 7
    %v652 = vadd.s32 %v651, 24
    %653 = vset.pattern.permute.xlu0 %v652
    %654 = vperm.xlu0 %653, %v434
    %v655 = vpop.permute.xlu0 %654
    %v656 = vlaneseq
    %v657 = vshrl.u32 %v656, 7
    %v658 = vadd.s32 %v657, 16
    %659 = vset.pattern.permute.xlu0 %v658
    %660 = vperm.xlu0 %659, %v447
    %v661 = vpop.permute.xlu0 %660
    %v662 = vlaneseq
    %v663 = vshrl.u32 %v662, 7
    %v664 = vadd.s32 %v663, 24
    %665 = vset.pattern.permute.xlu0 %v664
    %666 = vperm.xlu0 %665, %v447
    %v667 = vpop.permute.xlu0 %666
    %v668 = vlaneseq
    %v669 = vshrl.u32 %v668, 7
    %v670 = vadd.s32 %v669, 48
    %671 = vset.pattern.permute.xlu0 %v670
    %672 = vperm.xlu0 %671, %v356
    %v673 = vpop.permute.xlu0 %672
    %v674 = vlaneseq
    %v675 = vshrl.u32 %v674, 7
    %v676 = vadd.s32 %v675, 56
    %677 = vset.pattern.permute.xlu0 %v676
    %678 = vperm.xlu0 %677, %v356
    %v679 = vpop.permute.xlu0 %678
    %v680 = vlaneseq
    %v681 = vshrl.u32 %v680, 7
    %v682 = vadd.s32 %v681, 48
    %683 = vset.pattern.permute.xlu0 %v682
    %684 = vperm.xlu0 %683, %v369
    %v685 = vpop.permute.xlu0 %684
    %v686 = vlaneseq
    %v687 = vshrl.u32 %v686, 7
    %v688 = vadd.s32 %v687, 56
    %689 = vset.pattern.permute.xlu0 %v688
    %690 = vperm.xlu0 %689, %v369
    %v691 = vpop.permute.xlu0 %690
    %v692 = vlaneseq
    %v693 = vshrl.u32 %v692, 7
    %v694 = vadd.s32 %v693, 48
    %695 = vset.pattern.permute.xlu0 %v694
    %696 = vperm.xlu0 %695, %v382
    %v697 = vpop.permute.xlu0 %696
    %v698 = vlaneseq
    %v699 = vshrl.u32 %v698, 7
    %v700 = vadd.s32 %v699, 56
    %701 = vset.pattern.permute.xlu0 %v700
    %702 = vperm.xlu0 %701, %v382
    %v703 = vpop.permute.xlu0 %702
    %v704 = vlaneseq
    %v705 = vshrl.u32 %v704, 7
    %v706 = vadd.s32 %v705, 48
    %707 = vset.pattern.permute.xlu0 %v706
    %708 = vperm.xlu0 %707, %v395
    %v709 = vpop.permute.xlu0 %708
    %v710 = vlaneseq
    %v711 = vshrl.u32 %v710, 7
    %v712 = vadd.s32 %v711, 56
    %713 = vset.pattern.permute.xlu0 %v712
    %714 = vperm.xlu0 %713, %v395
    %v715 = vpop.permute.xlu0 %714
    %v716 = vlaneseq
    %v717 = vshrl.u32 %v716, 7
    %v718 = vadd.s32 %v717, 48
    %719 = vset.pattern.permute.xlu0 %v718
    %720 = vperm.xlu0 %719, %v408
    %v721 = vpop.permute.xlu0 %720
    %v722 = vlaneseq
    %v723 = vshrl.u32 %v722, 7
    %v724 = vadd.s32 %v723, 56
    %725 = vset.pattern.permute.xlu0 %v724
    %726 = vperm.xlu0 %725, %v408
    %v727 = vpop.permute.xlu0 %726
    %v728 = vlaneseq
    %v729 = vshrl.u32 %v728, 7
    %v730 = vadd.s32 %v729, 48
    %731 = vset.pattern.permute.xlu0 %v730
    %732 = vperm.xlu0 %731, %v421
    %v733 = vpop.permute.xlu0 %732
    %v734 = vlaneseq
    %v735 = vshrl.u32 %v734, 7
    %v736 = vadd.s32 %v735, 56
    %737 = vset.pattern.permute.xlu0 %v736
    %738 = vperm.xlu0 %737, %v421
    %v739 = vpop.permute.xlu0 %738
    %v740 = vlaneseq
    %v741 = vshrl.u32 %v740, 7
    %v742 = vadd.s32 %v741, 48
    %743 = vset.pattern.permute.xlu0 %v742
    %744 = vperm.xlu0 %743, %v434
    %v745 = vpop.permute.xlu0 %744
    %v746 = vlaneseq
    %v747 = vshrl.u32 %v746, 7
    %v748 = vadd.s32 %v747, 56
    %749 = vset.pattern.permute.xlu0 %v748
    %750 = vperm.xlu0 %749, %v434
    %v751 = vpop.permute.xlu0 %750
    %v752 = vlaneseq
    %v753 = vshrl.u32 %v752, 7
    %v754 = vadd.s32 %v753, 48
    %755 = vset.pattern.permute.xlu0 %v754
    %756 = vperm.xlu0 %755, %v447
    %v757 = vpop.permute.xlu0 %756
    %v758 = vlaneseq
    %v759 = vshrl.u32 %v758, 7
    %v760 = vadd.s32 %v759, 56
    %761 = vset.pattern.permute.xlu0 %v760
    %762 = vperm.xlu0 %761, %v447
    %v763 = vpop.permute.xlu0 %762
    %v764 = vsel %vm49, %v577, %v673
    %v765 = vsel %vm49, %v583, %v679
    %v766 = vsel %vm49, %v589, %v685
    %v767 = vsel %vm49, %v595, %v691
    %v768 = vsel %vm49, %v601, %v697
    %v769 = vsel %vm49, %v607, %v703
    %v770 = vsel %vm49, %v613, %v709
    %v771 = vsel %vm49, %v619, %v715
    %v772 = vsel %vm49, %v625, %v721
    %v773 = vsel %vm49, %v631, %v727
    %v774 = vsel %vm49, %v637, %v733
    %v775 = vsel %vm49, %v643, %v739
    %v776 = vsel %vm49, %v649, %v745
    %v777 = vsel %vm49, %v655, %v751
    %v778 = vsel %vm49, %v661, %v757
    %v779 = vsel %vm49, %v667, %v763
    %v780 = vld [vmem:[%s7] sm:$0xff]
    %v781 = vld [vmem:[%s7 + $0x8] sm:$0xff]
    %v783 = vrot.slane %v355, 1
    %v784 = vrot.slane %v355, 2
    %v785 = vrot.slane %v355, 3
    %v786 = vrot.slane %v355, 4
    %v787 = vrot.slane %v355, 5
    %v788 = vrot.slane %v355, 6
    %v789 = vrot.slane %v355, 7
    %v790 = vperm.slane %v355, 0
    %v791 = vperm.slane %v783, 0
    %v792 = vperm.slane %v784, 0
    %v793 = vperm.slane %v785, 0
    %v794 = vperm.slane %v786, 0
    %v795 = vperm.slane %v787, 0
    %v796 = vperm.slane %v788, 0
    %v797 = vperm.slane %v789, 0
    %v806 = vmul.f32 %v790, %v780
    %v807 = vmul.f32 %v790, %v781
    %v808 = vmul.f32 %v791, %v780
    %v809 = vmul.f32 %v791, %v781
    %v810 = vmul.f32 %v792, %v780
    %v811 = vmul.f32 %v792, %v781
    %v812 = vmul.f32 %v793, %v780
    %v813 = vmul.f32 %v793, %v781
    %v814 = vmul.f32 %v794, %v780
    %v815 = vmul.f32 %v794, %v781
    %v816 = vmul.f32 %v795, %v780
    %v817 = vmul.f32 %v795, %v781
    %v818 = vmul.f32 %v796, %v780
    %v819 = vmul.f32 %v796, %v781
    %v820 = vmul.f32 %v797, %v780
    %v821 = vmul.f32 %v797, %v781
    %v822 = vmul.f32 %v806, 1.442695
    %v823 = vpow.pop %v822
    %v824 = vmul.f32 %v807, 1.442695
    %v825 = vpow.pop %v824
    %v826 = vmul.f32 %v808, 1.442695
    %v827 = vpow.pop %v826
    %v828 = vmul.f32 %v809, 1.442695
    %v829 = vpow.pop %v828
    %v830 = vmul.f32 %v810, 1.442695
    %v831 = vpow.pop %v830
    %v832 = vmul.f32 %v811, 1.442695
    %v833 = vpow.pop %v832
    %v834 = vmul.f32 %v812, 1.442695
    %v835 = vpow.pop %v834
    %v836 = vmul.f32 %v813, 1.442695
    %v837 = vpow.pop %v836
    %v838 = vmul.f32 %v814, 1.442695
    %v839 = vpow.pop %v838
    %v840 = vmul.f32 %v815, 1.442695
    %v841 = vpow.pop %v840
    %v842 = vmul.f32 %v816, 1.442695
    %v843 = vpow.pop %v842
    %v844 = vmul.f32 %v817, 1.442695
    %v845 = vpow.pop %v844
    %v846 = vmul.f32 %v818, 1.442695
    %v847 = vpow.pop %v846
    %v848 = vmul.f32 %v819, 1.442695
    %v849 = vpow.pop %v848
    %v850 = vmul.f32 %v820, 1.442695
    %v851 = vpow.pop %v850
    %v852 = vmul.f32 %v821, 1.442695
    %v853 = vpow.pop %v852
    %v854 = vmul.f32 %v355, %v214
    %v856 = vrot.slane %v854, 1
    %v857 = vrot.slane %v854, 2
    %v858 = vrot.slane %v854, 3
    %v859 = vrot.slane %v854, 4
    %v860 = vrot.slane %v854, 5
    %v861 = vrot.slane %v854, 6
    %v862 = vrot.slane %v854, 7
    %v863 = vperm.slane %v854, 0
    %v864 = vperm.slane %v856, 0
    %v865 = vperm.slane %v857, 0
    %v866 = vperm.slane %v858, 0
    %v867 = vperm.slane %v859, 0
    %v868 = vperm.slane %v860, 0
    %v869 = vperm.slane %v861, 0
    %v870 = vperm.slane %v862, 0
    %v879 = vmul.f32 %v863, %v556
    %v880 = vmul.f32 %v863, %v557
    %v881 = vmul.f32 %v864, %v558
    %v882 = vmul.f32 %v864, %v559
    %v883 = vmul.f32 %v865, %v560
    %v884 = vmul.f32 %v865, %v561
    %v885 = vmul.f32 %v866, %v562
    %v886 = vmul.f32 %v866, %v563
    %v887 = vmul.f32 %v867, %v564
    %v888 = vmul.f32 %v867, %v565
    %v889 = vmul.f32 %v868, %v566
    %v890 = vmul.f32 %v868, %v567
    %v891 = vmul.f32 %v869, %v568
    %v892 = vmul.f32 %v869, %v569
    %v893 = vmul.f32 %v870, %v570
    %v894 = vmul.f32 %v870, %v571
    %v895 = vmul.f32 %v823, 0.0
    %v896 = vmul.f32 %v825, 0.0
    %v897 = vadd.f32 %v895, %v879
    %v898 = vadd.f32 %v896, %v880
    %v899 = vmul.f32 %v827, %v897
    %v900 = vmul.f32 %v829, %v898
    %v901 = vadd.f32 %v899, %v881
    %v902 = vadd.f32 %v900, %v882
    %v903 = vmul.f32 %v831, %v901
    %v904 = vmul.f32 %v833, %v902
    %v905 = vadd.f32 %v903, %v883
    %v906 = vadd.f32 %v904, %v884
    %v907 = vmul.f32 %v835, %v905
    %v908 = vmul.f32 %v837, %v906
    %v909 = vadd.f32 %v907, %v885
    %v910 = vadd.f32 %v908, %v886
    %v911 = vmul.f32 %v839, %v909
    %v912 = vmul.f32 %v841, %v910
    %v913 = vadd.f32 %v911, %v887
    %v914 = vadd.f32 %v912, %v888
    %v915 = vmul.f32 %v843, %v913
    %v916 = vmul.f32 %v845, %v914
    %v917 = vadd.f32 %v915, %v889
    %v918 = vadd.f32 %v916, %v890
    %v919 = vmul.f32 %v847, %v917
    %v920 = vmul.f32 %v849, %v918
    %v921 = vadd.f32 %v919, %v891
    %v922 = vadd.f32 %v920, %v892
    %v923 = vmul.f32 %v851, %v921
    %v924 = vmul.f32 %v853, %v922
    %v925 = vadd.f32 %v923, %v893
    %v926 = vadd.f32 %v924, %v894
    %v927 = vmul.f32 %v897, %v764
    %v928 = vmul.f32 %v898, %v765
    %v929 = vmul.f32 %v901, %v766
    %v930 = vmul.f32 %v902, %v767
    %v931 = vmul.f32 %v905, %v768
    %v932 = vmul.f32 %v906, %v769
    %v933 = vmul.f32 %v909, %v770
    %v934 = vmul.f32 %v910, %v771
    %v935 = vmul.f32 %v913, %v772
    %v936 = vmul.f32 %v914, %v773
    %v937 = vmul.f32 %v917, %v774
    %v938 = vmul.f32 %v918, %v775
    %v939 = vmul.f32 %v921, %v776
    %v940 = vmul.f32 %v922, %v777
    %v941 = vmul.f32 %v925, %v778
    %v942 = vmul.f32 %v926, %v779
    %v943 = vadd.f32 %v927, %v928
    %v944 = vrot.slane %v943, 4
    %v945 = vadd.f32 %v943, %v944
    %v946 = vrot.slane %v945, 2
    %v947 = vadd.f32 %v945, %v946
    %v948 = vrot.slane %v947, 1
    %v949 = vadd.f32 %v947, %v948
    %v950 = vadd.f32 %v929, %v930
    %v951 = vrot.slane %v950, 4
    %v952 = vadd.f32 %v950, %v951
    %v953 = vrot.slane %v952, 2
    %v954 = vadd.f32 %v952, %v953
    %v955 = vrot.slane %v954, 1
    %v956 = vadd.f32 %v954, %v955
    %v957 = vadd.f32 %v931, %v932
    %v958 = vrot.slane %v957, 4
    %v959 = vadd.f32 %v957, %v958
    %v960 = vrot.slane %v959, 2
    %v961 = vadd.f32 %v959, %v960
    %v962 = vrot.slane %v961, 1
    %v963 = vadd.f32 %v961, %v962
    %v964 = vadd.f32 %v933, %v934
    %v965 = vrot.slane %v964, 4
    %v966 = vadd.f32 %v964, %v965
    %v967 = vrot.slane %v966, 2
    %v968 = vadd.f32 %v966, %v967
    %v969 = vrot.slane %v968, 1
    %v970 = vadd.f32 %v968, %v969
    %v971 = vadd.f32 %v935, %v936
    %v972 = vrot.slane %v971, 4
    %v973 = vadd.f32 %v971, %v972
    %v974 = vrot.slane %v973, 2
    %v975 = vadd.f32 %v973, %v974
    %v976 = vrot.slane %v975, 1
    %v977 = vadd.f32 %v975, %v976
    %v978 = vadd.f32 %v937, %v938
    %v979 = vrot.slane %v978, 4
    %v980 = vadd.f32 %v978, %v979
    %v981 = vrot.slane %v980, 2
    %v982 = vadd.f32 %v980, %v981
    %v983 = vrot.slane %v982, 1
    %v984 = vadd.f32 %v982, %v983
    %v985 = vadd.f32 %v939, %v940
    %v986 = vrot.slane %v985, 4
    %v987 = vadd.f32 %v985, %v986
    %v988 = vrot.slane %v987, 2
    %v989 = vadd.f32 %v987, %v988
    %v990 = vrot.slane %v989, 1
    %v991 = vadd.f32 %v989, %v990
    %v992 = vadd.f32 %v941, %v942
    %v993 = vrot.slane %v992, 4
    %v994 = vadd.f32 %v992, %v993
    %v995 = vrot.slane %v994, 2
    %v996 = vadd.f32 %v994, %v995
    %v997 = vrot.slane %v996, 1
    %v998 = vadd.f32 %v996, %v997
    %v999 = vld [vmem:[%s8] sm:$0x1]
    %v1001 = vperm.slane %v999, 0
    %v1003 = vmul.f32 %v214, %v1001
    %v1005 = vrot.slane %v1003, 1
    %v1006 = vrot.slane %v1003, 2
    %v1007 = vrot.slane %v1003, 3
    %v1008 = vrot.slane %v1003, 4
    %v1009 = vrot.slane %v1003, 5
    %v1010 = vrot.slane %v1003, 6
    %v1011 = vrot.slane %v1003, 7
    %v1020 = vadd.f32 %v949, %v1003
    %v1021 = vadd.f32 %v956, %v1005
    %v1022 = vadd.f32 %v963, %v1006
    %v1023 = vadd.f32 %v970, %v1007
    %v1024 = vadd.f32 %v977, %v1008
    %v1025 = vadd.f32 %v984, %v1009
    %v1026 = vadd.f32 %v991, %v1010
    %v1027 = vadd.f32 %v998, %v1011
    %v1028 = vxor.u32 %v166, 2147483648
    %v1029 = vmul.f32 %v1028, 1.442695
    %v1030 = vpow.pop %v1029
    %v1031 = vadd.f32 %v1030, 1.0
    %v1032 = vrcp.pop %v1031
    %v1033 = vmul.f32 %v1031, %v1032
    %v1034 = vsub.f32 1.0, %v1033
    %v1035 = vmul.f32 %v1032, %v1034
    %v1036 = vadd.f32 %v1032, %v1035
    %vm1037 = vweird.f32 %v1031
    %vm1038 = vweird.f32 %v1032
    %vm1039 = vmor %vm1037, %vm1038
    %v1040 = vsel %vm1039, %v1032, %v1036
    %v1041 = vand.u32 2147483647, %v1031
    %vm1042 = vcmp.eq.f32.partialorder %v1041, 8.507059e+37
    %v1043 = vand.u32 %v1031, 2147483648
    %v1044 = vor.u32 1.1754944e-38, %v1043
    %v1045 = vsel %vm1042, %v1044, %v1040
    %v1046 = vmul.f32 1.0, %v1045
    %v1047 = vmul.f32 %v166, %v1046
    %v1049 = vrot.slane %v1047, 1
    %v1050 = vrot.slane %v1047, 2
    %v1051 = vrot.slane %v1047, 3
    %v1052 = vrot.slane %v1047, 4
    %v1053 = vrot.slane %v1047, 5
    %v1054 = vrot.slane %v1047, 6
    %v1055 = vrot.slane %v1047, 7
    %v1064 = vmul.f32 %v1020, %v1047
    %v1065 = vmul.f32 %v1021, %v1049
    %v1066 = vmul.f32 %v1022, %v1050
    %v1067 = vmul.f32 %v1023, %v1051
    %v1068 = vmul.f32 %v1024, %v1052
    %v1069 = vmul.f32 %v1025, %v1053
    %v1070 = vmul.f32 %v1026, %v1054
    %v1071 = vmul.f32 %v1027, %v1055
    %v1072 = vpack.c.bf16 %v1064, %v1064
    %v1073 = vpack.c.bf16 %v1065, %v1065
    %v1074 = vpack.c.bf16 %v1066, %v1066
    %v1075 = vpack.c.bf16 %v1067, %v1067
    %v1076 = vpack.c.bf16 %v1068, %v1068
    %v1077 = vpack.c.bf16 %v1069, %v1069
    %v1078 = vpack.c.bf16 %v1070, %v1070
    %v1079 = vpack.c.bf16 %v1071, %v1071
    %v1080 = vld [vmem:[%s9] sm:$0xf]
    %v1081 = vld [vmem:[%s9 + $0x4] sm:$0xf]
    %v1082 = vld [vmem:[%s9 + $0x8] sm:$0xf]
    %v1083 = vld [vmem:[%s9 + $0xc] sm:$0xf]
    %v1084 = vld [vmem:[%s9 + $0x10] sm:$0xf]
    %v1085 = vld [vmem:[%s9 + $0x14] sm:$0xf]
    %v1086 = vld [vmem:[%s9 + $0x18] sm:$0xf]
    %v1087 = vld [vmem:[%s9 + $0x1c] sm:$0xf]
    %v1088 = vld [vmem:[%s9 + $0x20] sm:$0xf]
    %v1089 = vld [vmem:[%s9 + $0x24] sm:$0xf]
    %v1090 = vld [vmem:[%s9 + $0x28] sm:$0xf]
    %v1091 = vld [vmem:[%s9 + $0x2c] sm:$0xf]
    %v1092 = vld [vmem:[%s9 + $0x30] sm:$0xf]
    %v1093 = vld [vmem:[%s9 + $0x34] sm:$0xf]
    %v1094 = vld [vmem:[%s9 + $0x38] sm:$0xf]
    %v1095 = vld [vmem:[%s9 + $0x3c] sm:$0xf]
    %v1104 = vunpack.c.l.b16 %v1072
    %v1105 = vunpack.c.l.b16 %v1073
    %v1106 = vunpack.c.l.b16 %v1074
    %v1107 = vunpack.c.l.b16 %v1075
    %v1108 = vunpack.c.l.b16 %v1076
    %v1109 = vunpack.c.l.b16 %v1077
    %v1110 = vunpack.c.l.b16 %v1078
    %v1111 = vunpack.c.l.b16 %v1079
    %v1112 = vrot.slane %v1105, 7
    %vm1113 = vcmask 1041409
    %v1114 = vsel %vm1113, %v1112, %v1104
    %v1115 = vrot.slane %v1106, 6
    %vm1116 = vcmask 1042434
    %v1117 = vsel %vm1116, %v1115, %v1114
    %v1118 = vrot.slane %v1107, 5
    %vm1119 = vcmask 1043459
    %v1120 = vsel %vm1119, %v1118, %v1117
    %v1121 = vrot.slane %v1108, 4
    %vm1122 = vcmask 1044484
    %v1123 = vsel %vm1122, %v1121, %v1120
    %v1124 = vrot.slane %v1109, 3
    %vm1125 = vcmask 1045509
    %v1126 = vsel %vm1125, %v1124, %v1123
    %v1127 = vrot.slane %v1110, 2
    %vm1128 = vcmask 1046534
    %v1129 = vsel %vm1128, %v1127, %v1126
    %v1130 = vrot.slane %v1111, 1
    %vm1131 = vcmask 1047559
    %v1132 = vsel %vm1131, %v1130, %v1129
    %v1133 = vpack.c.b16 %v1132, %v1132
    %v1151 = vunpack.c.l.b16 %v1080
    %v1152 = vunpack.c.l.b16 %v1081
    %v1153 = vunpack.c.l.b16 %v1082
    %v1154 = vunpack.c.l.b16 %v1083
    %v1155 = vunpack.c.l.b16 %v1084
    %v1156 = vunpack.c.l.b16 %v1085
    %v1157 = vunpack.c.l.b16 %v1086
    %v1158 = vunpack.c.l.b16 %v1087
    %v1159 = vunpack.c.l.b16 %v1088
    %v1160 = vunpack.c.l.b16 %v1089
    %v1161 = vunpack.c.l.b16 %v1090
    %v1162 = vunpack.c.l.b16 %v1091
    %v1163 = vunpack.c.l.b16 %v1092
    %v1164 = vunpack.c.l.b16 %v1093
    %v1165 = vunpack.c.l.b16 %v1094
    %v1166 = vunpack.c.l.b16 %v1095
    %v1167 = vpack.c.b16 %v1152, %v1151
    %v1168 = vpack.c.b16 %v1154, %v1153
    %v1169 = vpack.c.b16 %v1156, %v1155
    %v1170 = vpack.c.b16 %v1158, %v1157
    %v1171 = vpack.c.b16 %v1160, %v1159
    %v1172 = vpack.c.b16 %v1162, %v1161
    %v1173 = vpack.c.b16 %v1164, %v1163
    %v1174 = vpack.c.b16 %v1166, %v1165
    %1183 = vmatpush.bf16.msra.mxu0 %v1174
    %1184 = vmatpush.bf16.msra.mxu0 %v1173
    %1185 = vmatpush.bf16.msra.mxu0 %v1172
    %1186 = vmatpush.bf16.msra.mxu0 %v1171
    %1187 = vmatpush.bf16.msra.mxu0 %v1170
    %1188 = vmatpush.bf16.msra.mxu0 %v1169
    %1189 = vmatpush.bf16.msra.mxu0 %v1168
    %1190 = vmatpush.bf16.msra.mxu0 %v1167
    %1191 = vmatmul.bf16.gmra.mxu0 %v1133
    %v1192 = vpop.f32.mrf.mxu0
    %v1193 = vadd.f32 0.0, %v1192
    %v1194 = vpop.f32.mrf.mxu0
    %1195 = vdwg.mxu0
    %v1196 = vadd.f32 %v43, %v1193
    %s1197 = scalar_lea.vmem %s1, 1
    %v1198 = vld [vmem:[%s1197] sm:$0x1]
    %v1199 = vmul.f32 %v1196, %v1196
    %v1200 = vsel %vm46, %v1199, 0.0
    %v1201 = vsel %vm53, %v1200, 0.0
    %1202 = vadd.xlane.f32.xlu0 %v1201
    %v1203 = vpop.xlane.xlu0 %1202
    %v1204 = vsel %vm46, 0.0, %v1199
    %v1205 = vsel %vm53, %v1204, 0.0
    %1206 = vadd.xlane.f32.xlu0 %v1205
    %v1207 = vpop.xlane.xlu0 %1206
    %v1208 = vmul.f32 %v1203, 0.03125
    %v1209 = vadd.f32 %v1208, 1e-05
    %v1210 = vrsqrt.pop %v1209
    %v1211 = vmul.f32 %v1210, %v1209
    %v1212 = vmul.f32 %v1211, %v1210
    %v1213 = vmul.f32 0.5, %v1212
    %v1214 = vsub.f32 1.5, %v1213
    %v1215 = vmul.f32 %v1210, %v1214
    %vm1216 = vweird.f32 %v1209
    %vm1217 = vweird.f32 %v1210
    %vm1218 = vmor %vm1216, %vm1217
    %v1219 = vsel %vm1218, %v1210, %v1215
    %v1220 = vmul.f32 %v1207, 0.03125
    %v1221 = vadd.f32 %v1220, 1e-05
    %v1222 = vrsqrt.pop %v1221
    %v1223 = vmul.f32 %v1222, %v1221
    %v1224 = vmul.f32 %v1223, %v1222
    %v1225 = vmul.f32 0.5, %v1224
    %v1226 = vsub.f32 1.5, %v1225
    %v1227 = vmul.f32 %v1222, %v1226
    %vm1228 = vweird.f32 %v1221
    %vm1229 = vweird.f32 %v1222
    %vm1230 = vmor %vm1228, %vm1229
    %v1231 = vsel %vm1230, %v1222, %v1227
    %v1232 = vsel %vm46, %v1219, %v1231
    %v1233 = vmul.f32 %v1196, %v1232
    %v1235 = vperm.slane %v1198, 0
    %v1237 = vmul.f32 %v1233, %v1235
    %v1238 = vpack.c.bf16 %v1237, %v1237
    %s1239 = scalar_lea.vmem %s2, 64
    %v1240 = vld [vmem:[%s1239] sm:$0xff]
    %v1241 = vld [vmem:[%s1239 + $0x8] sm:$0xff]
    %v1242 = vld [vmem:[%s1239 + $0x10] sm:$0xff]
    %v1243 = vld [vmem:[%s1239 + $0x18] sm:$0xff]
    %v1244 = vld [vmem:[%s1239 + $0x20] sm:$0xff]
    %v1245 = vld [vmem:[%s1239 + $0x28] sm:$0xff]
    %v1246 = vld [vmem:[%s1239 + $0x30] sm:$0xff]
    %v1247 = vld [vmem:[%s1239 + $0x38] sm:$0xff]
    %v1256 = vunpack.c.l.b16 %v1240
    %v1257 = vunpack.c.h.b16 %v1240
    %v1258 = vunpack.c.l.b16 %v1241
    %v1259 = vunpack.c.h.b16 %v1241
    %v1260 = vunpack.c.l.b16 %v1242
    %v1261 = vunpack.c.h.b16 %v1242
    %v1262 = vunpack.c.l.b16 %v1243
    %v1263 = vunpack.c.h.b16 %v1243
    %v1264 = vunpack.c.l.b16 %v1244
    %v1265 = vunpack.c.h.b16 %v1244
    %v1266 = vunpack.c.l.b16 %v1245
    %v1267 = vunpack.c.h.b16 %v1245
    %v1268 = vunpack.c.l.b16 %v1246
    %v1269 = vunpack.c.h.b16 %v1246
    %v1270 = vunpack.c.l.b16 %v1247
    %v1271 = vunpack.c.h.b16 %v1247
    %v1272 = vpack.c.b16 %v1258, %v1256
    %v1273 = vpack.c.b16 %v1259, %v1257
    %v1274 = vpack.c.b16 %v1262, %v1260
    %v1275 = vpack.c.b16 %v1263, %v1261
    %v1276 = vpack.c.b16 %v1266, %v1264
    %v1277 = vpack.c.b16 %v1267, %v1265
    %v1278 = vpack.c.b16 %v1270, %v1268
    %v1279 = vpack.c.b16 %v1271, %v1269
    %v1289 = vsel %vm53, %v1238, 0
    %1291 = vmatpush.bf16.msra.mxu0 0
    %1292 = vmatpush.bf16.msra.mxu0 0
    %1293 = vmatpush.bf16.msra.mxu0 0
    %1294 = vmatpush.bf16.msra.mxu0 0
    %1295 = vmatpush.bf16.msra.mxu0 %v1278
    %1296 = vmatpush.bf16.msra.mxu0 %v1276
    %1297 = vmatpush.bf16.msra.mxu0 %v1274
    %1298 = vmatpush.bf16.msra.mxu0 %v1272
    %1299 = vmatmul.bf16.gmra.mxu0 %v1289
    %v1300 = vpop.f32.mrf.mxu0
    %v1301 = vadd.f32 0.0, %v1300
    %v1302 = vpop.f32.mrf.mxu0
    %1303 = vdwg.mxu0
    %1304 = vmatpush.bf16.msra.mxu0 0
    %1305 = vmatpush.bf16.msra.mxu0 0
    %1306 = vmatpush.bf16.msra.mxu0 0
    %1307 = vmatpush.bf16.msra.mxu0 0
    %1308 = vmatpush.bf16.msra.mxu0 %v1279
    %1309 = vmatpush.bf16.msra.mxu0 %v1277
    %1310 = vmatpush.bf16.msra.mxu0 %v1275
    %1311 = vmatpush.bf16.msra.mxu0 %v1273
    %1312 = vmatmul.bf16.gmra.mxu0 %v1289
    %v1313 = vpop.f32.mrf.mxu0
    %v1314 = vadd.f32 0.0, %v1313
    %v1315 = vpop.f32.mrf.mxu0
    %1316 = vdwg.mxu0
    %s1317 = scalar_lea.vmem %s3, 4
    %v1318 = vld [vmem:[%s1317] sm:$0xf]
    %s1319 = scalar_lea.vmem %s4, 1
    %v1320 = vld [vmem:[%s1319] sm:$0x1]
    %v1321 = vperm.slane %v1318, 3
    %v1322 = vmul.f32 %v1301, %v1321
    %v1324 = vperm.slane %v1320, 0
    %v1326 = vadd.f32 %v1324, %v1322
    %v1327 = vrot.slane %v1301, 7
    %v1328 = vsel %vm178, %v1327, 0.0
    %v1329 = vperm.slane %v1318, 2
    %v1330 = vmul.f32 %v1328, %v1329
    %v1331 = vadd.f32 %v1326, %v1330
    %v1332 = vrot.slane %v1301, 6
    %v1333 = vsel %vm184, %v1332, 0.0
    %v1334 = vperm.slane %v1318, 1
    %v1335 = vmul.f32 %v1333, %v1334
    %v1336 = vadd.f32 %v1331, %v1335
    %v1337 = vrot.slane %v1301, 5
    %v1338 = vsel %vm190, %v1337, 0.0
    %v1339 = vperm.slane %v1318, 0
    %v1340 = vmul.f32 %v1338, %v1339
    %v1341 = vadd.f32 %v1336, %v1340
    %v1342 = vxor.u32 %v1341, 2147483648
    %v1343 = vmul.f32 %v1342, 1.442695
    %v1344 = vpow.pop %v1343
    %v1345 = vadd.f32 %v1344, 1.0
    %v1346 = vrcp.pop %v1345
    %v1347 = vmul.f32 %v1345, %v1346
    %v1348 = vsub.f32 1.0, %v1347
    %v1349 = vmul.f32 %v1346, %v1348
    %v1350 = vadd.f32 %v1346, %v1349
    %vm1351 = vweird.f32 %v1345
    %vm1352 = vweird.f32 %v1346
    %vm1353 = vmor %vm1351, %vm1352
    %v1354 = vsel %vm1353, %v1346, %v1350
    %v1355 = vand.u32 2147483647, %v1345
    %vm1356 = vcmp.eq.f32.partialorder %v1355, 8.507059e+37
    %v1357 = vand.u32 %v1345, 2147483648
    %v1358 = vor.u32 1.1754944e-38, %v1357
    %v1359 = vsel %vm1356, %v1358, %v1354
    %v1360 = vmul.f32 1.0, %v1359
    %v1361 = vmul.f32 %v1341, %v1360
    %v1362 = vpack.c.bf16 %v1361, %v1361
    %s1363 = scalar_lea.vmem %s5, 128
    %v1364 = vld [vmem:[%s1363] sm:$0xff]
    %v1365 = vld [vmem:[%s1363 + $0x8] sm:$0xff]
    %v1366 = vld [vmem:[%s1363 + $0x10] sm:$0xff]
    %v1367 = vld [vmem:[%s1363 + $0x18] sm:$0xff]
    %v1368 = vld [vmem:[%s1363 + $0x20] sm:$0xff]
    %v1369 = vld [vmem:[%s1363 + $0x28] sm:$0xff]
    %v1370 = vld [vmem:[%s1363 + $0x30] sm:$0xff]
    %v1371 = vld [vmem:[%s1363 + $0x38] sm:$0xff]
    %v1372 = vld [vmem:[%s1363 + $0x40] sm:$0xff]
    %v1373 = vld [vmem:[%s1363 + $0x48] sm:$0xff]
    %v1374 = vld [vmem:[%s1363 + $0x50] sm:$0xff]
    %v1375 = vld [vmem:[%s1363 + $0x58] sm:$0xff]
    %v1376 = vld [vmem:[%s1363 + $0x60] sm:$0xff]
    %v1377 = vld [vmem:[%s1363 + $0x68] sm:$0xff]
    %v1378 = vld [vmem:[%s1363 + $0x70] sm:$0xff]
    %v1379 = vld [vmem:[%s1363 + $0x78] sm:$0xff]
    %v1396 = vunpack.c.l.b16 %v1364
    %v1397 = vunpack.c.h.b16 %v1364
    %v1398 = vunpack.c.l.b16 %v1365
    %v1399 = vunpack.c.h.b16 %v1365
    %v1400 = vunpack.c.l.b16 %v1366
    %v1401 = vunpack.c.h.b16 %v1366
    %v1402 = vunpack.c.l.b16 %v1367
    %v1403 = vunpack.c.h.b16 %v1367
    %v1404 = vunpack.c.l.b16 %v1368
    %v1405 = vunpack.c.h.b16 %v1368
    %v1406 = vunpack.c.l.b16 %v1369
    %v1407 = vunpack.c.h.b16 %v1369
    %v1408 = vunpack.c.l.b16 %v1370
    %v1409 = vunpack.c.h.b16 %v1370
    %v1410 = vunpack.c.l.b16 %v1371
    %v1411 = vunpack.c.h.b16 %v1371
    %v1412 = vunpack.c.l.b16 %v1372
    %v1413 = vunpack.c.h.b16 %v1372
    %v1414 = vunpack.c.l.b16 %v1373
    %v1415 = vunpack.c.h.b16 %v1373
    %v1416 = vunpack.c.l.b16 %v1374
    %v1417 = vunpack.c.h.b16 %v1374
    %v1418 = vunpack.c.l.b16 %v1375
    %v1419 = vunpack.c.h.b16 %v1375
    %v1420 = vunpack.c.l.b16 %v1376
    %v1421 = vunpack.c.h.b16 %v1376
    %v1422 = vunpack.c.l.b16 %v1377
    %v1423 = vunpack.c.h.b16 %v1377
    %v1424 = vunpack.c.l.b16 %v1378
    %v1425 = vunpack.c.h.b16 %v1378
    %v1426 = vunpack.c.l.b16 %v1379
    %v1427 = vunpack.c.h.b16 %v1379
    %v1428 = vpack.c.b16 %v1398, %v1396
    %v1429 = vpack.c.b16 %v1399, %v1397
    %v1430 = vpack.c.b16 %v1402, %v1400
    %v1431 = vpack.c.b16 %v1403, %v1401
    %v1432 = vpack.c.b16 %v1406, %v1404
    %v1433 = vpack.c.b16 %v1407, %v1405
    %v1434 = vpack.c.b16 %v1410, %v1408
    %v1435 = vpack.c.b16 %v1411, %v1409
    %v1436 = vpack.c.b16 %v1414, %v1412
    %v1437 = vpack.c.b16 %v1415, %v1413
    %v1438 = vpack.c.b16 %v1418, %v1416
    %v1439 = vpack.c.b16 %v1419, %v1417
    %v1440 = vpack.c.b16 %v1422, %v1420
    %v1441 = vpack.c.b16 %v1423, %v1421
    %v1442 = vpack.c.b16 %v1426, %v1424
    %v1443 = vpack.c.b16 %v1427, %v1425
    %1460 = vmatpush.bf16.msra.mxu0 %v1442
    %1461 = vmatpush.bf16.msra.mxu0 %v1440
    %1462 = vmatpush.bf16.msra.mxu0 %v1438
    %1463 = vmatpush.bf16.msra.mxu0 %v1436
    %1464 = vmatpush.bf16.msra.mxu0 %v1434
    %1465 = vmatpush.bf16.msra.mxu0 %v1432
    %1466 = vmatpush.bf16.msra.mxu0 %v1430
    %1467 = vmatpush.bf16.msra.mxu0 %v1428
    %1468 = vmatmul.bf16.gmra.mxu0 %v1362
    %v1469 = vpop.f32.mrf.mxu0
    %v1470 = vadd.f32 0.0, %v1469
    %v1471 = vpop.f32.mrf.mxu0
    %1472 = vdwg.mxu0
    %1473 = vmatpush.bf16.msra.mxu0 %v1443
    %1474 = vmatpush.bf16.msra.mxu0 %v1441
    %1475 = vmatpush.bf16.msra.mxu0 %v1439
    %1476 = vmatpush.bf16.msra.mxu0 %v1437
    %1477 = vmatpush.bf16.msra.mxu0 %v1435
    %1478 = vmatpush.bf16.msra.mxu0 %v1433
    %1479 = vmatpush.bf16.msra.mxu0 %v1431
    %1480 = vmatpush.bf16.msra.mxu0 %v1429
    %1481 = vmatmul.bf16.gmra.mxu0 %v1362
    %v1482 = vpop.f32.mrf.mxu0
    %v1483 = vadd.f32 0.0, %v1482
    %v1484 = vpop.f32.mrf.mxu0
    %1485 = vdwg.mxu0
    %s1486 = scalar_lea.vmem %s6, 1
    %v1487 = vld [vmem:[%s1486] sm:$0x1]
    %v1489 = vperm.slane %v1487, 0
    %v1491 = vadd.f32 %v1470, %v1489
    %vm1492 = vcmp.gt.f32.partialorder %v1491, 20.0
    %v1493 = vmul.f32 %v1491, 1.442695
    %v1494 = vpow.pop %v1493
    %v1495 = vadd.f32 %v1494, 1.0
    %v1496 = vlog2.pop %v1495
    %v1497 = vmul.f32 %v1496, 0.6931472
    %v1498 = vmul.f32 -0.5, %v1494
    %v1499 = vadd.f32 %v1498, 1.0
    %v1500 = vmul.f32 %v1499, %v1494
    %v1501 = vand.u32 2147483647, %v1494
    %vm1502 = vcmp.lt.f32.partialorder %v1501, 0.0004427343
    %v1503 = vsel %vm1502, %v1500, %v1497
    %v1504 = vsel %vm1492, %v1491, %v1503
    %v1505 = vperm.slane %v1483, 0
    %v1506 = vlaneseq
    %v1507 = vshrl.u32 %v1506, 7
    %1509 = vset.pattern.permute.xlu0 %v1507
    %1510 = vperm.xlu0 %1509, %v1505
    %v1511 = vpop.permute.xlu0 %1510
    %v1512 = vlaneseq
    %v1513 = vshrl.u32 %v1512, 7
    %v1514 = vadd.s32 %v1513, 8
    %1515 = vset.pattern.permute.xlu0 %v1514
    %1516 = vperm.xlu0 %1515, %v1505
    %v1517 = vpop.permute.xlu0 %1516
    %v1518 = vperm.slane %v1483, 1
    %v1519 = vlaneseq
    %v1520 = vshrl.u32 %v1519, 7
    %1522 = vset.pattern.permute.xlu0 %v1520
    %1523 = vperm.xlu0 %1522, %v1518
    %v1524 = vpop.permute.xlu0 %1523
    %v1525 = vlaneseq
    %v1526 = vshrl.u32 %v1525, 7
    %v1527 = vadd.s32 %v1526, 8
    %1528 = vset.pattern.permute.xlu0 %v1527
    %1529 = vperm.xlu0 %1528, %v1518
    %v1530 = vpop.permute.xlu0 %1529
    %v1531 = vperm.slane %v1483, 2
    %v1532 = vlaneseq
    %v1533 = vshrl.u32 %v1532, 7
    %1535 = vset.pattern.permute.xlu0 %v1533
    %1536 = vperm.xlu0 %1535, %v1531
    %v1537 = vpop.permute.xlu0 %1536
    %v1538 = vlaneseq
    %v1539 = vshrl.u32 %v1538, 7
    %v1540 = vadd.s32 %v1539, 8
    %1541 = vset.pattern.permute.xlu0 %v1540
    %1542 = vperm.xlu0 %1541, %v1531
    %v1543 = vpop.permute.xlu0 %1542
    %v1544 = vperm.slane %v1483, 3
    %v1545 = vlaneseq
    %v1546 = vshrl.u32 %v1545, 7
    %1548 = vset.pattern.permute.xlu0 %v1546
    %1549 = vperm.xlu0 %1548, %v1544
    %v1550 = vpop.permute.xlu0 %1549
    %v1551 = vlaneseq
    %v1552 = vshrl.u32 %v1551, 7
    %v1553 = vadd.s32 %v1552, 8
    %1554 = vset.pattern.permute.xlu0 %v1553
    %1555 = vperm.xlu0 %1554, %v1544
    %v1556 = vpop.permute.xlu0 %1555
    %v1557 = vperm.slane %v1483, 4
    %v1558 = vlaneseq
    %v1559 = vshrl.u32 %v1558, 7
    %1561 = vset.pattern.permute.xlu0 %v1559
    %1562 = vperm.xlu0 %1561, %v1557
    %v1563 = vpop.permute.xlu0 %1562
    %v1564 = vlaneseq
    %v1565 = vshrl.u32 %v1564, 7
    %v1566 = vadd.s32 %v1565, 8
    %1567 = vset.pattern.permute.xlu0 %v1566
    %1568 = vperm.xlu0 %1567, %v1557
    %v1569 = vpop.permute.xlu0 %1568
    %v1570 = vperm.slane %v1483, 5
    %v1571 = vlaneseq
    %v1572 = vshrl.u32 %v1571, 7
    %1574 = vset.pattern.permute.xlu0 %v1572
    %1575 = vperm.xlu0 %1574, %v1570
    %v1576 = vpop.permute.xlu0 %1575
    %v1577 = vlaneseq
    %v1578 = vshrl.u32 %v1577, 7
    %v1579 = vadd.s32 %v1578, 8
    %1580 = vset.pattern.permute.xlu0 %v1579
    %1581 = vperm.xlu0 %1580, %v1570
    %v1582 = vpop.permute.xlu0 %1581
    %v1583 = vperm.slane %v1483, 6
    %v1584 = vlaneseq
    %v1585 = vshrl.u32 %v1584, 7
    %1587 = vset.pattern.permute.xlu0 %v1585
    %1588 = vperm.xlu0 %1587, %v1583
    %v1589 = vpop.permute.xlu0 %1588
    %v1590 = vlaneseq
    %v1591 = vshrl.u32 %v1590, 7
    %v1592 = vadd.s32 %v1591, 8
    %1593 = vset.pattern.permute.xlu0 %v1592
    %1594 = vperm.xlu0 %1593, %v1583
    %v1595 = vpop.permute.xlu0 %1594
    %v1596 = vperm.slane %v1483, 7
    %v1597 = vlaneseq
    %v1598 = vshrl.u32 %v1597, 7
    %1600 = vset.pattern.permute.xlu0 %v1598
    %1601 = vperm.xlu0 %1600, %v1596
    %v1602 = vpop.permute.xlu0 %1601
    %v1603 = vlaneseq
    %v1604 = vshrl.u32 %v1603, 7
    %v1605 = vadd.s32 %v1604, 8
    %1606 = vset.pattern.permute.xlu0 %v1605
    %1607 = vperm.xlu0 %1606, %v1596
    %v1608 = vpop.permute.xlu0 %1607
    %v1609 = vlaneseq
    %v1610 = vshrl.u32 %v1609, 7
    %v1611 = vadd.s32 %v1610, 32
    %1612 = vset.pattern.permute.xlu0 %v1611
    %1613 = vperm.xlu0 %1612, %v1505
    %v1614 = vpop.permute.xlu0 %1613
    %v1615 = vlaneseq
    %v1616 = vshrl.u32 %v1615, 7
    %v1617 = vadd.s32 %v1616, 40
    %1618 = vset.pattern.permute.xlu0 %v1617
    %1619 = vperm.xlu0 %1618, %v1505
    %v1620 = vpop.permute.xlu0 %1619
    %v1621 = vlaneseq
    %v1622 = vshrl.u32 %v1621, 7
    %v1623 = vadd.s32 %v1622, 32
    %1624 = vset.pattern.permute.xlu0 %v1623
    %1625 = vperm.xlu0 %1624, %v1518
    %v1626 = vpop.permute.xlu0 %1625
    %v1627 = vlaneseq
    %v1628 = vshrl.u32 %v1627, 7
    %v1629 = vadd.s32 %v1628, 40
    %1630 = vset.pattern.permute.xlu0 %v1629
    %1631 = vperm.xlu0 %1630, %v1518
    %v1632 = vpop.permute.xlu0 %1631
    %v1633 = vlaneseq
    %v1634 = vshrl.u32 %v1633, 7
    %v1635 = vadd.s32 %v1634, 32
    %1636 = vset.pattern.permute.xlu0 %v1635
    %1637 = vperm.xlu0 %1636, %v1531
    %v1638 = vpop.permute.xlu0 %1637
    %v1639 = vlaneseq
    %v1640 = vshrl.u32 %v1639, 7
    %v1641 = vadd.s32 %v1640, 40
    %1642 = vset.pattern.permute.xlu0 %v1641
    %1643 = vperm.xlu0 %1642, %v1531
    %v1644 = vpop.permute.xlu0 %1643
    %v1645 = vlaneseq
    %v1646 = vshrl.u32 %v1645, 7
    %v1647 = vadd.s32 %v1646, 32
    %1648 = vset.pattern.permute.xlu0 %v1647
    %1649 = vperm.xlu0 %1648, %v1544
    %v1650 = vpop.permute.xlu0 %1649
    %v1651 = vlaneseq
    %v1652 = vshrl.u32 %v1651, 7
    %v1653 = vadd.s32 %v1652, 40
    %1654 = vset.pattern.permute.xlu0 %v1653
    %1655 = vperm.xlu0 %1654, %v1544
    %v1656 = vpop.permute.xlu0 %1655
    %v1657 = vlaneseq
    %v1658 = vshrl.u32 %v1657, 7
    %v1659 = vadd.s32 %v1658, 32
    %1660 = vset.pattern.permute.xlu0 %v1659
    %1661 = vperm.xlu0 %1660, %v1557
    %v1662 = vpop.permute.xlu0 %1661
    %v1663 = vlaneseq
    %v1664 = vshrl.u32 %v1663, 7
    %v1665 = vadd.s32 %v1664, 40
    %1666 = vset.pattern.permute.xlu0 %v1665
    %1667 = vperm.xlu0 %1666, %v1557
    %v1668 = vpop.permute.xlu0 %1667
    %v1669 = vlaneseq
    %v1670 = vshrl.u32 %v1669, 7
    %v1671 = vadd.s32 %v1670, 32
    %1672 = vset.pattern.permute.xlu0 %v1671
    %1673 = vperm.xlu0 %1672, %v1570
    %v1674 = vpop.permute.xlu0 %1673
    %v1675 = vlaneseq
    %v1676 = vshrl.u32 %v1675, 7
    %v1677 = vadd.s32 %v1676, 40
    %1678 = vset.pattern.permute.xlu0 %v1677
    %1679 = vperm.xlu0 %1678, %v1570
    %v1680 = vpop.permute.xlu0 %1679
    %v1681 = vlaneseq
    %v1682 = vshrl.u32 %v1681, 7
    %v1683 = vadd.s32 %v1682, 32
    %1684 = vset.pattern.permute.xlu0 %v1683
    %1685 = vperm.xlu0 %1684, %v1583
    %v1686 = vpop.permute.xlu0 %1685
    %v1687 = vlaneseq
    %v1688 = vshrl.u32 %v1687, 7
    %v1689 = vadd.s32 %v1688, 40
    %1690 = vset.pattern.permute.xlu0 %v1689
    %1691 = vperm.xlu0 %1690, %v1583
    %v1692 = vpop.permute.xlu0 %1691
    %v1693 = vlaneseq
    %v1694 = vshrl.u32 %v1693, 7
    %v1695 = vadd.s32 %v1694, 32
    %1696 = vset.pattern.permute.xlu0 %v1695
    %1697 = vperm.xlu0 %1696, %v1596
    %v1698 = vpop.permute.xlu0 %1697
    %v1699 = vlaneseq
    %v1700 = vshrl.u32 %v1699, 7
    %v1701 = vadd.s32 %v1700, 40
    %1702 = vset.pattern.permute.xlu0 %v1701
    %1703 = vperm.xlu0 %1702, %v1596
    %v1704 = vpop.permute.xlu0 %1703
    %v1705 = vsel %vm49, %v1511, %v1614
    %v1706 = vsel %vm49, %v1517, %v1620
    %v1707 = vsel %vm49, %v1524, %v1626
    %v1708 = vsel %vm49, %v1530, %v1632
    %v1709 = vsel %vm49, %v1537, %v1638
    %v1710 = vsel %vm49, %v1543, %v1644
    %v1711 = vsel %vm49, %v1550, %v1650
    %v1712 = vsel %vm49, %v1556, %v1656
    %v1713 = vsel %vm49, %v1563, %v1662
    %v1714 = vsel %vm49, %v1569, %v1668
    %v1715 = vsel %vm49, %v1576, %v1674
    %v1716 = vsel %vm49, %v1582, %v1680
    %v1717 = vsel %vm49, %v1589, %v1686
    %v1718 = vsel %vm49, %v1595, %v1692
    %v1719 = vsel %vm49, %v1602, %v1698
    %v1720 = vsel %vm49, %v1608, %v1704
    %v1721 = vlaneseq
    %v1722 = vshrl.u32 %v1721, 7
    %v1723 = vadd.s32 %v1722, 16
    %1724 = vset.pattern.permute.xlu0 %v1723
    %1725 = vperm.xlu0 %1724, %v1505
    %v1726 = vpop.permute.xlu0 %1725
    %v1727 = vlaneseq
    %v1728 = vshrl.u32 %v1727, 7
    %v1729 = vadd.s32 %v1728, 24
    %1730 = vset.pattern.permute.xlu0 %v1729
    %1731 = vperm.xlu0 %1730, %v1505
    %v1732 = vpop.permute.xlu0 %1731
    %v1733 = vlaneseq
    %v1734 = vshrl.u32 %v1733, 7
    %v1735 = vadd.s32 %v1734, 16
    %1736 = vset.pattern.permute.xlu0 %v1735
    %1737 = vperm.xlu0 %1736, %v1518
    %v1738 = vpop.permute.xlu0 %1737
    %v1739 = vlaneseq
    %v1740 = vshrl.u32 %v1739, 7
    %v1741 = vadd.s32 %v1740, 24
    %1742 = vset.pattern.permute.xlu0 %v1741
    %1743 = vperm.xlu0 %1742, %v1518
    %v1744 = vpop.permute.xlu0 %1743
    %v1745 = vlaneseq
    %v1746 = vshrl.u32 %v1745, 7
    %v1747 = vadd.s32 %v1746, 16
    %1748 = vset.pattern.permute.xlu0 %v1747
    %1749 = vperm.xlu0 %1748, %v1531
    %v1750 = vpop.permute.xlu0 %1749
    %v1751 = vlaneseq
    %v1752 = vshrl.u32 %v1751, 7
    %v1753 = vadd.s32 %v1752, 24
    %1754 = vset.pattern.permute.xlu0 %v1753
    %1755 = vperm.xlu0 %1754, %v1531
    %v1756 = vpop.permute.xlu0 %1755
    %v1757 = vlaneseq
    %v1758 = vshrl.u32 %v1757, 7
    %v1759 = vadd.s32 %v1758, 16
    %1760 = vset.pattern.permute.xlu0 %v1759
    %1761 = vperm.xlu0 %1760, %v1544
    %v1762 = vpop.permute.xlu0 %1761
    %v1763 = vlaneseq
    %v1764 = vshrl.u32 %v1763, 7
    %v1765 = vadd.s32 %v1764, 24
    %1766 = vset.pattern.permute.xlu0 %v1765
    %1767 = vperm.xlu0 %1766, %v1544
    %v1768 = vpop.permute.xlu0 %1767
    %v1769 = vlaneseq
    %v1770 = vshrl.u32 %v1769, 7
    %v1771 = vadd.s32 %v1770, 16
    %1772 = vset.pattern.permute.xlu0 %v1771
    %1773 = vperm.xlu0 %1772, %v1557
    %v1774 = vpop.permute.xlu0 %1773
    %v1775 = vlaneseq
    %v1776 = vshrl.u32 %v1775, 7
    %v1777 = vadd.s32 %v1776, 24
    %1778 = vset.pattern.permute.xlu0 %v1777
    %1779 = vperm.xlu0 %1778, %v1557
    %v1780 = vpop.permute.xlu0 %1779
    %v1781 = vlaneseq
    %v1782 = vshrl.u32 %v1781, 7
    %v1783 = vadd.s32 %v1782, 16
    %1784 = vset.pattern.permute.xlu0 %v1783
    %1785 = vperm.xlu0 %1784, %v1570
    %v1786 = vpop.permute.xlu0 %1785
    %v1787 = vlaneseq
    %v1788 = vshrl.u32 %v1787, 7
    %v1789 = vadd.s32 %v1788, 24
    %1790 = vset.pattern.permute.xlu0 %v1789
    %1791 = vperm.xlu0 %1790, %v1570
    %v1792 = vpop.permute.xlu0 %1791
    %v1793 = vlaneseq
    %v1794 = vshrl.u32 %v1793, 7
    %v1795 = vadd.s32 %v1794, 16
    %1796 = vset.pattern.permute.xlu0 %v1795
    %1797 = vperm.xlu0 %1796, %v1583
    %v1798 = vpop.permute.xlu0 %1797
    %v1799 = vlaneseq
    %v1800 = vshrl.u32 %v1799, 7
    %v1801 = vadd.s32 %v1800, 24
    %1802 = vset.pattern.permute.xlu0 %v1801
    %1803 = vperm.xlu0 %1802, %v1583
    %v1804 = vpop.permute.xlu0 %1803
    %v1805 = vlaneseq
    %v1806 = vshrl.u32 %v1805, 7
    %v1807 = vadd.s32 %v1806, 16
    %1808 = vset.pattern.permute.xlu0 %v1807
    %1809 = vperm.xlu0 %1808, %v1596
    %v1810 = vpop.permute.xlu0 %1809
    %v1811 = vlaneseq
    %v1812 = vshrl.u32 %v1811, 7
    %v1813 = vadd.s32 %v1812, 24
    %1814 = vset.pattern.permute.xlu0 %v1813
    %1815 = vperm.xlu0 %1814, %v1596
    %v1816 = vpop.permute.xlu0 %1815
    %v1817 = vlaneseq
    %v1818 = vshrl.u32 %v1817, 7
    %v1819 = vadd.s32 %v1818, 48
    %1820 = vset.pattern.permute.xlu0 %v1819
    %1821 = vperm.xlu0 %1820, %v1505
    %v1822 = vpop.permute.xlu0 %1821
    %v1823 = vlaneseq
    %v1824 = vshrl.u32 %v1823, 7
    %v1825 = vadd.s32 %v1824, 56
    %1826 = vset.pattern.permute.xlu0 %v1825
    %1827 = vperm.xlu0 %1826, %v1505
    %v1828 = vpop.permute.xlu0 %1827
    %v1829 = vlaneseq
    %v1830 = vshrl.u32 %v1829, 7
    %v1831 = vadd.s32 %v1830, 48
    %1832 = vset.pattern.permute.xlu0 %v1831
    %1833 = vperm.xlu0 %1832, %v1518
    %v1834 = vpop.permute.xlu0 %1833
    %v1835 = vlaneseq
    %v1836 = vshrl.u32 %v1835, 7
    %v1837 = vadd.s32 %v1836, 56
    %1838 = vset.pattern.permute.xlu0 %v1837
    %1839 = vperm.xlu0 %1838, %v1518
    %v1840 = vpop.permute.xlu0 %1839
    %v1841 = vlaneseq
    %v1842 = vshrl.u32 %v1841, 7
    %v1843 = vadd.s32 %v1842, 48
    %1844 = vset.pattern.permute.xlu0 %v1843
    %1845 = vperm.xlu0 %1844, %v1531
    %v1846 = vpop.permute.xlu0 %1845
    %v1847 = vlaneseq
    %v1848 = vshrl.u32 %v1847, 7
    %v1849 = vadd.s32 %v1848, 56
    %1850 = vset.pattern.permute.xlu0 %v1849
    %1851 = vperm.xlu0 %1850, %v1531
    %v1852 = vpop.permute.xlu0 %1851
    %v1853 = vlaneseq
    %v1854 = vshrl.u32 %v1853, 7
    %v1855 = vadd.s32 %v1854, 48
    %1856 = vset.pattern.permute.xlu0 %v1855
    %1857 = vperm.xlu0 %1856, %v1544
    %v1858 = vpop.permute.xlu0 %1857
    %v1859 = vlaneseq
    %v1860 = vshrl.u32 %v1859, 7
    %v1861 = vadd.s32 %v1860, 56
    %1862 = vset.pattern.permute.xlu0 %v1861
    %1863 = vperm.xlu0 %1862, %v1544
    %v1864 = vpop.permute.xlu0 %1863
    %v1865 = vlaneseq
    %v1866 = vshrl.u32 %v1865, 7
    %v1867 = vadd.s32 %v1866, 48
    %1868 = vset.pattern.permute.xlu0 %v1867
    %1869 = vperm.xlu0 %1868, %v1557
    %v1870 = vpop.permute.xlu0 %1869
    %v1871 = vlaneseq
    %v1872 = vshrl.u32 %v1871, 7
    %v1873 = vadd.s32 %v1872, 56
    %1874 = vset.pattern.permute.xlu0 %v1873
    %1875 = vperm.xlu0 %1874, %v1557
    %v1876 = vpop.permute.xlu0 %1875
    %v1877 = vlaneseq
    %v1878 = vshrl.u32 %v1877, 7
    %v1879 = vadd.s32 %v1878, 48
    %1880 = vset.pattern.permute.xlu0 %v1879
    %1881 = vperm.xlu0 %1880, %v1570
    %v1882 = vpop.permute.xlu0 %1881
    %v1883 = vlaneseq
    %v1884 = vshrl.u32 %v1883, 7
    %v1885 = vadd.s32 %v1884, 56
    %1886 = vset.pattern.permute.xlu0 %v1885
    %1887 = vperm.xlu0 %1886, %v1570
    %v1888 = vpop.permute.xlu0 %1887
    %v1889 = vlaneseq
    %v1890 = vshrl.u32 %v1889, 7
    %v1891 = vadd.s32 %v1890, 48
    %1892 = vset.pattern.permute.xlu0 %v1891
    %1893 = vperm.xlu0 %1892, %v1583
    %v1894 = vpop.permute.xlu0 %1893
    %v1895 = vlaneseq
    %v1896 = vshrl.u32 %v1895, 7
    %v1897 = vadd.s32 %v1896, 56
    %1898 = vset.pattern.permute.xlu0 %v1897
    %1899 = vperm.xlu0 %1898, %v1583
    %v1900 = vpop.permute.xlu0 %1899
    %v1901 = vlaneseq
    %v1902 = vshrl.u32 %v1901, 7
    %v1903 = vadd.s32 %v1902, 48
    %1904 = vset.pattern.permute.xlu0 %v1903
    %1905 = vperm.xlu0 %1904, %v1596
    %v1906 = vpop.permute.xlu0 %1905
    %v1907 = vlaneseq
    %v1908 = vshrl.u32 %v1907, 7
    %v1909 = vadd.s32 %v1908, 56
    %1910 = vset.pattern.permute.xlu0 %v1909
    %1911 = vperm.xlu0 %1910, %v1596
    %v1912 = vpop.permute.xlu0 %1911
    %v1913 = vsel %vm49, %v1726, %v1822
    %v1914 = vsel %vm49, %v1732, %v1828
    %v1915 = vsel %vm49, %v1738, %v1834
    %v1916 = vsel %vm49, %v1744, %v1840
    %v1917 = vsel %vm49, %v1750, %v1846
    %v1918 = vsel %vm49, %v1756, %v1852
    %v1919 = vsel %vm49, %v1762, %v1858
    %v1920 = vsel %vm49, %v1768, %v1864
    %v1921 = vsel %vm49, %v1774, %v1870
    %v1922 = vsel %vm49, %v1780, %v1876
    %v1923 = vsel %vm49, %v1786, %v1882
    %v1924 = vsel %vm49, %v1792, %v1888
    %v1925 = vsel %vm49, %v1798, %v1894
    %v1926 = vsel %vm49, %v1804, %v1900
    %v1927 = vsel %vm49, %v1810, %v1906
    %v1928 = vsel %vm49, %v1816, %v1912
    %s1929 = scalar_lea.vmem %s7, 16
    %v1930 = vld [vmem:[%s1929] sm:$0xff]
    %v1931 = vld [vmem:[%s1929 + $0x8] sm:$0xff]
    %v1933 = vrot.slane %v1504, 1
    %v1934 = vrot.slane %v1504, 2
    %v1935 = vrot.slane %v1504, 3
    %v1936 = vrot.slane %v1504, 4
    %v1937 = vrot.slane %v1504, 5
    %v1938 = vrot.slane %v1504, 6
    %v1939 = vrot.slane %v1504, 7
    %v1940 = vperm.slane %v1504, 0
    %v1941 = vperm.slane %v1933, 0
    %v1942 = vperm.slane %v1934, 0
    %v1943 = vperm.slane %v1935, 0
    %v1944 = vperm.slane %v1936, 0
    %v1945 = vperm.slane %v1937, 0
    %v1946 = vperm.slane %v1938, 0
    %v1947 = vperm.slane %v1939, 0
    %v1956 = vmul.f32 %v1940, %v1930
    %v1957 = vmul.f32 %v1940, %v1931
    %v1958 = vmul.f32 %v1941, %v1930
    %v1959 = vmul.f32 %v1941, %v1931
    %v1960 = vmul.f32 %v1942, %v1930
    %v1961 = vmul.f32 %v1942, %v1931
    %v1962 = vmul.f32 %v1943, %v1930
    %v1963 = vmul.f32 %v1943, %v1931
    %v1964 = vmul.f32 %v1944, %v1930
    %v1965 = vmul.f32 %v1944, %v1931
    %v1966 = vmul.f32 %v1945, %v1930
    %v1967 = vmul.f32 %v1945, %v1931
    %v1968 = vmul.f32 %v1946, %v1930
    %v1969 = vmul.f32 %v1946, %v1931
    %v1970 = vmul.f32 %v1947, %v1930
    %v1971 = vmul.f32 %v1947, %v1931
    %v1972 = vmul.f32 %v1956, 1.442695
    %v1973 = vpow.pop %v1972
    %v1974 = vmul.f32 %v1957, 1.442695
    %v1975 = vpow.pop %v1974
    %v1976 = vmul.f32 %v1958, 1.442695
    %v1977 = vpow.pop %v1976
    %v1978 = vmul.f32 %v1959, 1.442695
    %v1979 = vpow.pop %v1978
    %v1980 = vmul.f32 %v1960, 1.442695
    %v1981 = vpow.pop %v1980
    %v1982 = vmul.f32 %v1961, 1.442695
    %v1983 = vpow.pop %v1982
    %v1984 = vmul.f32 %v1962, 1.442695
    %v1985 = vpow.pop %v1984
    %v1986 = vmul.f32 %v1963, 1.442695
    %v1987 = vpow.pop %v1986
    %v1988 = vmul.f32 %v1964, 1.442695
    %v1989 = vpow.pop %v1988
    %v1990 = vmul.f32 %v1965, 1.442695
    %v1991 = vpow.pop %v1990
    %v1992 = vmul.f32 %v1966, 1.442695
    %v1993 = vpow.pop %v1992
    %v1994 = vmul.f32 %v1967, 1.442695
    %v1995 = vpow.pop %v1994
    %v1996 = vmul.f32 %v1968, 1.442695
    %v1997 = vpow.pop %v1996
    %v1998 = vmul.f32 %v1969, 1.442695
    %v1999 = vpow.pop %v1998
    %v2000 = vmul.f32 %v1970, 1.442695
    %v2001 = vpow.pop %v2000
    %v2002 = vmul.f32 %v1971, 1.442695
    %v2003 = vpow.pop %v2002
    %v2004 = vmul.f32 %v1504, %v1361
    %v2006 = vrot.slane %v2004, 1
    %v2007 = vrot.slane %v2004, 2
    %v2008 = vrot.slane %v2004, 3
    %v2009 = vrot.slane %v2004, 4
    %v2010 = vrot.slane %v2004, 5
    %v2011 = vrot.slane %v2004, 6
    %v2012 = vrot.slane %v2004, 7
    %v2013 = vperm.slane %v2004, 0
    %v2014 = vperm.slane %v2006, 0
    %v2015 = vperm.slane %v2007, 0
    %v2016 = vperm.slane %v2008, 0
    %v2017 = vperm.slane %v2009, 0
    %v2018 = vperm.slane %v2010, 0
    %v2019 = vperm.slane %v2011, 0
    %v2020 = vperm.slane %v2012, 0
    %v2029 = vmul.f32 %v2013, %v1705
    %v2030 = vmul.f32 %v2013, %v1706
    %v2031 = vmul.f32 %v2014, %v1707
    %v2032 = vmul.f32 %v2014, %v1708
    %v2033 = vmul.f32 %v2015, %v1709
    %v2034 = vmul.f32 %v2015, %v1710
    %v2035 = vmul.f32 %v2016, %v1711
    %v2036 = vmul.f32 %v2016, %v1712
    %v2037 = vmul.f32 %v2017, %v1713
    %v2038 = vmul.f32 %v2017, %v1714
    %v2039 = vmul.f32 %v2018, %v1715
    %v2040 = vmul.f32 %v2018, %v1716
    %v2041 = vmul.f32 %v2019, %v1717
    %v2042 = vmul.f32 %v2019, %v1718
    %v2043 = vmul.f32 %v2020, %v1719
    %v2044 = vmul.f32 %v2020, %v1720
    %v2045 = vmul.f32 %v1973, 0.0
    %v2046 = vmul.f32 %v1975, 0.0
    %v2047 = vadd.f32 %v2045, %v2029
    %v2048 = vadd.f32 %v2046, %v2030
    %v2049 = vmul.f32 %v1977, %v2047
    %v2050 = vmul.f32 %v1979, %v2048
    %v2051 = vadd.f32 %v2049, %v2031
    %v2052 = vadd.f32 %v2050, %v2032
    %v2053 = vmul.f32 %v1981, %v2051
    %v2054 = vmul.f32 %v1983, %v2052
    %v2055 = vadd.f32 %v2053, %v2033
    %v2056 = vadd.f32 %v2054, %v2034
    %v2057 = vmul.f32 %v1985, %v2055
    %v2058 = vmul.f32 %v1987, %v2056
    %v2059 = vadd.f32 %v2057, %v2035
    %v2060 = vadd.f32 %v2058, %v2036
    %v2061 = vmul.f32 %v1989, %v2059
    %v2062 = vmul.f32 %v1991, %v2060
    %v2063 = vadd.f32 %v2061, %v2037
    %v2064 = vadd.f32 %v2062, %v2038
    %v2065 = vmul.f32 %v1993, %v2063
    %v2066 = vmul.f32 %v1995, %v2064
    %v2067 = vadd.f32 %v2065, %v2039
    %v2068 = vadd.f32 %v2066, %v2040
    %v2069 = vmul.f32 %v1997, %v2067
    %v2070 = vmul.f32 %v1999, %v2068
    %v2071 = vadd.f32 %v2069, %v2041
    %v2072 = vadd.f32 %v2070, %v2042
    %v2073 = vmul.f32 %v2001, %v2071
    %v2074 = vmul.f32 %v2003, %v2072
    %v2075 = vadd.f32 %v2073, %v2043
    %v2076 = vadd.f32 %v2074, %v2044
    %v2077 = vmul.f32 %v2047, %v1913
    %v2078 = vmul.f32 %v2048, %v1914
    %v2079 = vmul.f32 %v2051, %v1915
    %v2080 = vmul.f32 %v2052, %v1916
    %v2081 = vmul.f32 %v2055, %v1917
    %v2082 = vmul.f32 %v2056, %v1918
    %v2083 = vmul.f32 %v2059, %v1919
    %v2084 = vmul.f32 %v2060, %v1920
    %v2085 = vmul.f32 %v2063, %v1921
    %v2086 = vmul.f32 %v2064, %v1922
    %v2087 = vmul.f32 %v2067, %v1923
    %v2088 = vmul.f32 %v2068, %v1924
    %v2089 = vmul.f32 %v2071, %v1925
    %v2090 = vmul.f32 %v2072, %v1926
    %v2091 = vmul.f32 %v2075, %v1927
    %v2092 = vmul.f32 %v2076, %v1928
    %v2093 = vadd.f32 %v2077, %v2078
    %v2094 = vrot.slane %v2093, 4
    %v2095 = vadd.f32 %v2093, %v2094
    %v2096 = vrot.slane %v2095, 2
    %v2097 = vadd.f32 %v2095, %v2096
    %v2098 = vrot.slane %v2097, 1
    %v2099 = vadd.f32 %v2097, %v2098
    %v2100 = vadd.f32 %v2079, %v2080
    %v2101 = vrot.slane %v2100, 4
    %v2102 = vadd.f32 %v2100, %v2101
    %v2103 = vrot.slane %v2102, 2
    %v2104 = vadd.f32 %v2102, %v2103
    %v2105 = vrot.slane %v2104, 1
    %v2106 = vadd.f32 %v2104, %v2105
    %v2107 = vadd.f32 %v2081, %v2082
    %v2108 = vrot.slane %v2107, 4
    %v2109 = vadd.f32 %v2107, %v2108
    %v2110 = vrot.slane %v2109, 2
    %v2111 = vadd.f32 %v2109, %v2110
    %v2112 = vrot.slane %v2111, 1
    %v2113 = vadd.f32 %v2111, %v2112
    %v2114 = vadd.f32 %v2083, %v2084
    %v2115 = vrot.slane %v2114, 4
    %v2116 = vadd.f32 %v2114, %v2115
    %v2117 = vrot.slane %v2116, 2
    %v2118 = vadd.f32 %v2116, %v2117
    %v2119 = vrot.slane %v2118, 1
    %v2120 = vadd.f32 %v2118, %v2119
    %v2121 = vadd.f32 %v2085, %v2086
    %v2122 = vrot.slane %v2121, 4
    %v2123 = vadd.f32 %v2121, %v2122
    %v2124 = vrot.slane %v2123, 2
    %v2125 = vadd.f32 %v2123, %v2124
    %v2126 = vrot.slane %v2125, 1
    %v2127 = vadd.f32 %v2125, %v2126
    %v2128 = vadd.f32 %v2087, %v2088
    %v2129 = vrot.slane %v2128, 4
    %v2130 = vadd.f32 %v2128, %v2129
    %v2131 = vrot.slane %v2130, 2
    %v2132 = vadd.f32 %v2130, %v2131
    %v2133 = vrot.slane %v2132, 1
    %v2134 = vadd.f32 %v2132, %v2133
    %v2135 = vadd.f32 %v2089, %v2090
    %v2136 = vrot.slane %v2135, 4
    %v2137 = vadd.f32 %v2135, %v2136
    %v2138 = vrot.slane %v2137, 2
    %v2139 = vadd.f32 %v2137, %v2138
    %v2140 = vrot.slane %v2139, 1
    %v2141 = vadd.f32 %v2139, %v2140
    %v2142 = vadd.f32 %v2091, %v2092
    %v2143 = vrot.slane %v2142, 4
    %v2144 = vadd.f32 %v2142, %v2143
    %v2145 = vrot.slane %v2144, 2
    %v2146 = vadd.f32 %v2144, %v2145
    %v2147 = vrot.slane %v2146, 1
    %v2148 = vadd.f32 %v2146, %v2147
    %s2149 = scalar_lea.vmem %s8, 1
    %v2150 = vld [vmem:[%s2149] sm:$0x1]
    %v2152 = vperm.slane %v2150, 0
    %v2154 = vmul.f32 %v1361, %v2152
    %v2156 = vrot.slane %v2154, 1
    %v2157 = vrot.slane %v2154, 2
    %v2158 = vrot.slane %v2154, 3
    %v2159 = vrot.slane %v2154, 4
    %v2160 = vrot.slane %v2154, 5
    %v2161 = vrot.slane %v2154, 6
    %v2162 = vrot.slane %v2154, 7
    %v2171 = vadd.f32 %v2099, %v2154
    %v2172 = vadd.f32 %v2106, %v2156
    %v2173 = vadd.f32 %v2113, %v2157
    %v2174 = vadd.f32 %v2120, %v2158
    %v2175 = vadd.f32 %v2127, %v2159
    %v2176 = vadd.f32 %v2134, %v2160
    %v2177 = vadd.f32 %v2141, %v2161
    %v2178 = vadd.f32 %v2148, %v2162
    %v2179 = vxor.u32 %v1314, 2147483648
    %v2180 = vmul.f32 %v2179, 1.442695
    %v2181 = vpow.pop %v2180
    %v2182 = vadd.f32 %v2181, 1.0
    %v2183 = vrcp.pop %v2182
    %v2184 = vmul.f32 %v2182, %v2183
    %v2185 = vsub.f32 1.0, %v2184
    %v2186 = vmul.f32 %v2183, %v2185
    %v2187 = vadd.f32 %v2183, %v2186
    %vm2188 = vweird.f32 %v2182
    %vm2189 = vweird.f32 %v2183
    %vm2190 = vmor %vm2188, %vm2189
    %v2191 = vsel %vm2190, %v2183, %v2187
    %v2192 = vand.u32 2147483647, %v2182
    %vm2193 = vcmp.eq.f32.partialorder %v2192, 8.507059e+37
    %v2194 = vand.u32 %v2182, 2147483648
    %v2195 = vor.u32 1.1754944e-38, %v2194
    %v2196 = vsel %vm2193, %v2195, %v2191
    %v2197 = vmul.f32 1.0, %v2196
    %v2198 = vmul.f32 %v1314, %v2197
    %v2200 = vrot.slane %v2198, 1
    %v2201 = vrot.slane %v2198, 2
    %v2202 = vrot.slane %v2198, 3
    %v2203 = vrot.slane %v2198, 4
    %v2204 = vrot.slane %v2198, 5
    %v2205 = vrot.slane %v2198, 6
    %v2206 = vrot.slane %v2198, 7
    %v2215 = vmul.f32 %v2171, %v2198
    %v2216 = vmul.f32 %v2172, %v2200
    %v2217 = vmul.f32 %v2173, %v2201
    %v2218 = vmul.f32 %v2174, %v2202
    %v2219 = vmul.f32 %v2175, %v2203
    %v2220 = vmul.f32 %v2176, %v2204
    %v2221 = vmul.f32 %v2177, %v2205
    %v2222 = vmul.f32 %v2178, %v2206
    %v2223 = vpack.c.bf16 %v2215, %v2215
    %v2224 = vpack.c.bf16 %v2216, %v2216
    %v2225 = vpack.c.bf16 %v2217, %v2217
    %v2226 = vpack.c.bf16 %v2218, %v2218
    %v2227 = vpack.c.bf16 %v2219, %v2219
    %v2228 = vpack.c.bf16 %v2220, %v2220
    %v2229 = vpack.c.bf16 %v2221, %v2221
    %v2230 = vpack.c.bf16 %v2222, %v2222
    %s2231 = scalar_lea.vmem %s9, 64
    %v2232 = vld [vmem:[%s2231] sm:$0xf]
    %v2233 = vld [vmem:[%s2231 + $0x4] sm:$0xf]
    %v2234 = vld [vmem:[%s2231 + $0x8] sm:$0xf]
    %v2235 = vld [vmem:[%s2231 + $0xc] sm:$0xf]
    %v2236 = vld [vmem:[%s2231 + $0x10] sm:$0xf]
    %v2237 = vld [vmem:[%s2231 + $0x14] sm:$0xf]
    %v2238 = vld [vmem:[%s2231 + $0x18] sm:$0xf]
    %v2239 = vld [vmem:[%s2231 + $0x1c] sm:$0xf]
    %v2240 = vld [vmem:[%s2231 + $0x20] sm:$0xf]
    %v2241 = vld [vmem:[%s2231 + $0x24] sm:$0xf]
    %v2242 = vld [vmem:[%s2231 + $0x28] sm:$0xf]
    %v2243 = vld [vmem:[%s2231 + $0x2c] sm:$0xf]
    %v2244 = vld [vmem:[%s2231 + $0x30] sm:$0xf]
    %v2245 = vld [vmem:[%s2231 + $0x34] sm:$0xf]
    %v2246 = vld [vmem:[%s2231 + $0x38] sm:$0xf]
    %v2247 = vld [vmem:[%s2231 + $0x3c] sm:$0xf]
    %v2256 = vunpack.c.l.b16 %v2223
    %v2257 = vunpack.c.l.b16 %v2224
    %v2258 = vunpack.c.l.b16 %v2225
    %v2259 = vunpack.c.l.b16 %v2226
    %v2260 = vunpack.c.l.b16 %v2227
    %v2261 = vunpack.c.l.b16 %v2228
    %v2262 = vunpack.c.l.b16 %v2229
    %v2263 = vunpack.c.l.b16 %v2230
    %v2264 = vrot.slane %v2257, 7
    %v2265 = vsel %vm1113, %v2264, %v2256
    %v2266 = vrot.slane %v2258, 6
    %v2267 = vsel %vm1116, %v2266, %v2265
    %v2268 = vrot.slane %v2259, 5
    %v2269 = vsel %vm1119, %v2268, %v2267
    %v2270 = vrot.slane %v2260, 4
    %v2271 = vsel %vm1122, %v2270, %v2269
    %v2272 = vrot.slane %v2261, 3
    %v2273 = vsel %vm1125, %v2272, %v2271
    %v2274 = vrot.slane %v2262, 2
    %v2275 = vsel %vm1128, %v2274, %v2273
    %v2276 = vrot.slane %v2263, 1
    %v2277 = vsel %vm1131, %v2276, %v2275
    %v2278 = vpack.c.b16 %v2277, %v2277
    %v2296 = vunpack.c.l.b16 %v2232
    %v2297 = vunpack.c.l.b16 %v2233
    %v2298 = vunpack.c.l.b16 %v2234
    %v2299 = vunpack.c.l.b16 %v2235
    %v2300 = vunpack.c.l.b16 %v2236
    %v2301 = vunpack.c.l.b16 %v2237
    %v2302 = vunpack.c.l.b16 %v2238
    %v2303 = vunpack.c.l.b16 %v2239
    %v2304 = vunpack.c.l.b16 %v2240
    %v2305 = vunpack.c.l.b16 %v2241
    %v2306 = vunpack.c.l.b16 %v2242
    %v2307 = vunpack.c.l.b16 %v2243
    %v2308 = vunpack.c.l.b16 %v2244
    %v2309 = vunpack.c.l.b16 %v2245
    %v2310 = vunpack.c.l.b16 %v2246
    %v2311 = vunpack.c.l.b16 %v2247
    %v2312 = vpack.c.b16 %v2297, %v2296
    %v2313 = vpack.c.b16 %v2299, %v2298
    %v2314 = vpack.c.b16 %v2301, %v2300
    %v2315 = vpack.c.b16 %v2303, %v2302
    %v2316 = vpack.c.b16 %v2305, %v2304
    %v2317 = vpack.c.b16 %v2307, %v2306
    %v2318 = vpack.c.b16 %v2309, %v2308
    %v2319 = vpack.c.b16 %v2311, %v2310
    %2328 = vmatpush.bf16.msra.mxu0 %v2319
    %2329 = vmatpush.bf16.msra.mxu0 %v2318
    %2330 = vmatpush.bf16.msra.mxu0 %v2317
    %2331 = vmatpush.bf16.msra.mxu0 %v2316
    %2332 = vmatpush.bf16.msra.mxu0 %v2315
    %2333 = vmatpush.bf16.msra.mxu0 %v2314
    %2334 = vmatpush.bf16.msra.mxu0 %v2313
    %2335 = vmatpush.bf16.msra.mxu0 %v2312
    %2336 = vmatmul.bf16.gmra.mxu0 %v2278
    %v2337 = vpop.f32.mrf.mxu0
    %v2338 = vadd.f32 0.0, %v2337
    %v2339 = vpop.f32.mrf.mxu0
    %2340 = vdwg.mxu0
    %v2341 = vadd.f32 %v1196, %v2338
    %v2342 = vld [vmem:[%s10] sm:$0x1]
    %v2343 = vmul.f32 %v2341, %v2341
    %v2344 = vsel %vm46, %v2343, 0.0
    %v2345 = vsel %vm53, %v2344, 0.0
    %2346 = vadd.xlane.f32.xlu0 %v2345
    %v2347 = vpop.xlane.xlu0 %2346
    %v2348 = vsel %vm46, 0.0, %v2343
    %v2349 = vsel %vm53, %v2348, 0.0
    %2350 = vadd.xlane.f32.xlu0 %v2349
    %v2351 = vpop.xlane.xlu0 %2350
    %v2352 = vmul.f32 %v2347, 0.03125
    %v2353 = vadd.f32 %v2352, 1e-05
    %v2354 = vrsqrt.pop %v2353
    %v2355 = vmul.f32 %v2354, %v2353
    %v2356 = vmul.f32 %v2355, %v2354
    %v2357 = vmul.f32 0.5, %v2356
    %v2358 = vsub.f32 1.5, %v2357
    %v2359 = vmul.f32 %v2354, %v2358
    %vm2360 = vweird.f32 %v2353
    %vm2361 = vweird.f32 %v2354
    %vm2362 = vmor %vm2360, %vm2361
    %v2363 = vsel %vm2362, %v2354, %v2359
    %v2364 = vmul.f32 %v2351, 0.03125
    %v2365 = vadd.f32 %v2364, 1e-05
    %v2366 = vrsqrt.pop %v2365
    %v2367 = vmul.f32 %v2366, %v2365
    %v2368 = vmul.f32 %v2367, %v2366
    %v2369 = vmul.f32 0.5, %v2368
    %v2370 = vsub.f32 1.5, %v2369
    %v2371 = vmul.f32 %v2366, %v2370
    %vm2372 = vweird.f32 %v2365
    %vm2373 = vweird.f32 %v2366
    %vm2374 = vmor %vm2372, %vm2373
    %v2375 = vsel %vm2374, %v2366, %v2371
    %v2376 = vsel %vm46, %v2363, %v2375
    %v2377 = vmul.f32 %v2341, %v2376
    %v2379 = vperm.slane %v2342, 0
    %v2381 = vmul.f32 %v2377, %v2379
    %v2382 = vpack.c.bf16 %v2381, %v2381
    %v2383 = vld [vmem:[%s11] sm:$0xff]
    %v2384 = vld [vmem:[%s11 + $0x8] sm:$0xff]
    %v2385 = vld [vmem:[%s11 + $0x10] sm:$0xff]
    %v2386 = vld [vmem:[%s11 + $0x18] sm:$0xff]
    %v2387 = vld [vmem:[%s11 + $0x20] sm:$0xff]
    %v2388 = vld [vmem:[%s11 + $0x28] sm:$0xff]
    %v2389 = vld [vmem:[%s11 + $0x30] sm:$0xff]
    %v2390 = vld [vmem:[%s11 + $0x38] sm:$0xff]
    %v2399 = vunpack.c.l.b16 %v2383
    %v2400 = vunpack.c.h.b16 %v2383
    %v2401 = vunpack.c.l.b16 %v2384
    %v2402 = vunpack.c.h.b16 %v2384
    %v2403 = vunpack.c.l.b16 %v2385
    %v2404 = vunpack.c.h.b16 %v2385
    %v2405 = vunpack.c.l.b16 %v2386
    %v2406 = vunpack.c.h.b16 %v2386
    %v2407 = vunpack.c.l.b16 %v2387
    %v2408 = vunpack.c.h.b16 %v2387
    %v2409 = vunpack.c.l.b16 %v2388
    %v2410 = vunpack.c.h.b16 %v2388
    %v2411 = vunpack.c.l.b16 %v2389
    %v2412 = vunpack.c.h.b16 %v2389
    %v2413 = vunpack.c.l.b16 %v2390
    %v2414 = vunpack.c.h.b16 %v2390
    %v2415 = vpack.c.b16 %v2401, %v2399
    %v2416 = vpack.c.b16 %v2402, %v2400
    %v2417 = vpack.c.b16 %v2405, %v2403
    %v2418 = vpack.c.b16 %v2406, %v2404
    %v2419 = vpack.c.b16 %v2409, %v2407
    %v2420 = vpack.c.b16 %v2410, %v2408
    %v2421 = vpack.c.b16 %v2413, %v2411
    %v2422 = vpack.c.b16 %v2414, %v2412
    %v2432 = vsel %vm53, %v2382, 0
    %2434 = vmatpush.bf16.msra.mxu0 0
    %2435 = vmatpush.bf16.msra.mxu0 0
    %2436 = vmatpush.bf16.msra.mxu0 0
    %2437 = vmatpush.bf16.msra.mxu0 0
    %2438 = vmatpush.bf16.msra.mxu0 %v2421
    %2439 = vmatpush.bf16.msra.mxu0 %v2419
    %2440 = vmatpush.bf16.msra.mxu0 %v2417
    %2441 = vmatpush.bf16.msra.mxu0 %v2415
    %2442 = vmatmul.bf16.gmra.mxu0 %v2432
    %v2443 = vpop.f32.mrf.mxu0
    %v2444 = vadd.f32 0.0, %v2443
    %v2445 = vpop.f32.mrf.mxu0
    %2446 = vdwg.mxu0
    %2447 = vmatpush.bf16.msra.mxu0 0
    %2448 = vmatpush.bf16.msra.mxu0 0
    %2449 = vmatpush.bf16.msra.mxu0 0
    %2450 = vmatpush.bf16.msra.mxu0 0
    %2451 = vmatpush.bf16.msra.mxu0 %v2422
    %2452 = vmatpush.bf16.msra.mxu0 %v2420
    %2453 = vmatpush.bf16.msra.mxu0 %v2418
    %2454 = vmatpush.bf16.msra.mxu0 %v2416
    %2455 = vmatmul.bf16.gmra.mxu0 %v2432
    %v2456 = vpop.f32.mrf.mxu0
    %v2457 = vadd.f32 0.0, %v2456
    %v2458 = vpop.f32.mrf.mxu0
    %2459 = vdwg.mxu0
    %2460 = vst [vmem:[#allocation2] sm:$0xff] %v2444
    %s2461 = scalar_lea.vmem [#allocation2], 8
    %2462 = vst [vmem:[%s2461] sm:$0xff] %v2457
    // Predicated region
    $region50: #{mamba_forward.1} parent=1 // pred_check
      _
    $region51: #{mamba_forward.1} parent=1 // pred_check_branch
      %2464 = sbr.rel (0) target = $region53
    $region52: #{mamba_forward.1} parent=1 // pred_region
      %2466 = vsyncadd [#allocation3], 0
      %s2467 = sshll.u32 [#allocation2], 4
      %s2468 = int_to_ptr.vmem [resolvable:$true] %s2467
      %s2469 = sshll.u32 %s12, 4
      %s2470 = int_to_ptr.hbm [resolvable:$true] %s2469
      %2475 = dma.vmem_to_hbm [thread:$0]  %s2468, 256, %s2470, [#allocation3], 128, 128, 8
    $region53: #{mamba_forward.1} parent=1 // pred_fallthru
      _
    // Predicated region
    $region54: #{mamba_forward.1} parent=1 // pred_check
      _
    $region55: #{mamba_forward.1} parent=1 // pred_check_branch
      %2477 = sbr.rel (0) target = $region57
    $region56: #{mamba_forward.1} parent=1 // pred_region
      %2479 = dma.done [#allocation3], 256
    $region57: #{mamba_forward.1} parent=1 // pred_fallthru
      _
    %2480 = vsyncpa [#allocation3], 1

</llo_original>
